<compile_context>
chip_gen: v6e
topology: v6e:2x2x1
jax: 0.10.0
libtpu: 0.0.40
codegen_flags: <defaults>
</compile_context>

<pallas_src>
import jax
import jax.numpy as jnp
from jax.experimental import pallas as pl
from jax.experimental.pallas import tpu as pltpu


def _make_mlp_kernel(n_layers: int, distribution: bool):
    """Kernel body: fused Linear/ReLU chain with optional softmax head."""

    def kernel(x_ref, *args):
        out_ref = args[-1]
        param_refs = args[:-1]  # w0, b0, w1, b1, ...
        # Feed operands to the MXU in their native dtype (f32 here, bf16 if the
        # caller passes bf16 params) and accumulate in f32 — no explicit upcast.
        h = x_ref[...]
        for i in range(n_layers):
            w = param_refs[2 * i][...]
            b = param_refs[2 * i + 1][...]          # (1, out), broadcasts over rows
            h = jnp.dot(h, w, preferred_element_type=jnp.float32)
            h = h + b.astype(jnp.float32)
            if i != n_layers - 1:
                # nn.ReLU — elementwise kept in f32 (v5e VPU has no bf16 path)
                h = jnp.maximum(h, 0.0)
        if distribution:
            # nn.Softmax(dim=-1); approx reciprocal uses the otherwise-idle EUP slot.
            m = jnp.max(h, axis=-1, keepdims=True)
            e = jnp.exp(h - m)
            h = e * pl.reciprocal(jnp.sum(e, axis=-1, keepdims=True), approx=True)
        out_ref[...] = h.astype(out_ref.dtype)

    return kernel


def _pick_batch_tile(batch, widths):
    """Largest batch tile that (a) divides the batch, (b) is a multiple of 8,
    (c) leaves >=2 grid steps (so v7x's two TensorCores both get work and the
    x/out DMAs overlap compute), (d) keeps f32 activations comfortably in VMEM."""
    act_budget = 16 << 20  # bytes reserved for activation tiles / temporaries
    max_w = max(widths)

    def act_bytes(tb):
        # double-buffered in/out tiles + widest f32 intermediates (with slack)
        return 4 * tb * (2 * widths[0] + 2 * widths[-1] + 2 * max_w)

    best = None
    cap = min(batch // 2, 1024)
    for tb in range(8, cap + 1, 8):
        if batch % tb == 0 and act_bytes(tb) <= act_budget:
            best = tb
    # tiny batches (<16 rows): a single latency-bound step is the right call
    return best if best is not None else batch


def _vmem_limit_bytes(tb, widths, weights, biases, param_buffers):
    param_bytes = sum(int(w.size) * w.dtype.itemsize for w in weights)
    param_bytes += sum(int(b.size) * b.dtype.itemsize for b in biases)
    io_bytes = 4 * tb * (widths[0] + widths[-1]) * 2      # double-buffered x/out tiles
    act_bytes = 4 * tb * max(widths) * 2                  # f32 intermediates / temps
    total = param_buffers * param_bytes + io_bytes + act_bytes + (8 << 20)
    # stay within v7x's 64 MiB physical VMEM; never below the ~32 MiB scoped default
    return int(min(max(total, 32 << 20), 64 << 20))


def mlp_forward(x, weights, biases, *, distribution=False, batch_tile=None,
                single_buffer_params=True):
    """Run the fused MLP Pallas kernel.

    x:       (B, layers[0])
    weights: list of (layers[i], layers[i+1])  (pass bf16 on v6e/v7x for full-rate MXU)
    biases:  list of (layers[i+1],)
    """
    n_layers = len(weights)
    B, d_in = x.shape
    d_out = weights[-1].shape[1]
    widths = [d_in] + [w.shape[1] for w in weights]

    tb = batch_tile or _pick_batch_tile(B, widths)
    assert B % tb == 0, f"batch {B} must be divisible by batch tile {tb}"

    biases2d = [b.reshape(1, -1) for b in biases]
    params_flat = []
    for w, b in zip(weights, biases2d):
        params_flat.extend([w, b])

    kernel = _make_mlp_kernel(n_layers, distribution)

    def build(single_buf):
        # Replicated weights/biases use the same block at every grid step, so
        # single-buffer them (halves their VMEM footprint vs. the default
        # double-buffering), leaving room for larger batch tiles.
        pkw = {"pipeline_mode": pl.Buffered(1)} if single_buf else {}
        in_specs = [pl.BlockSpec((tb, d_in), lambda i: (i, 0))]
        for w, b in zip(weights, biases2d):
            in_specs.append(pl.BlockSpec(w.shape, lambda i: (0, 0), **pkw))
            in_specs.append(pl.BlockSpec(b.shape, lambda i: (0, 0), **pkw))
        out_spec = pl.BlockSpec((tb, d_out), lambda i: (i, 0))
        return pl.pallas_call(
            kernel,
            out_shape=jax.ShapeDtypeStruct((B, d_out), jnp.float32),
            grid_spec=pltpu.PrefetchScalarGridSpec(
                num_scalar_prefetch=0,
                grid=(B // tb,),
                in_specs=in_specs,
                out_specs=out_spec,
            ),
            compiler_params=pltpu.CompilerParams(
                dimension_semantics=("parallel",),
                vmem_limit_bytes=_vmem_limit_bytes(
                    tb, widths, weights, biases, 1 if single_buf else 2),
            ),
        )

    if single_buffer_params:
        try:
            return build(True)(x, *params_flat)
        except Exception:
            # pipeline_mode / Buffered(1) not supported on this jax version:
            # fall back to default double-buffered replicated params.
            pass
    return build(False)(x, *params_flat)


def init_params(layers, key):
    """Deterministic init mirroring nn.Linear default (uniform +/- 1/sqrt(fan_in))."""
    weights, biases = [], []
    for i in range(len(layers) - 1):
        fan_in, fan_out = layers[i], layers[i + 1]
        key, kw, kb = jax.random.split(key, 3)
        bound = 1.0 / jnp.sqrt(fan_in)
        # stored as (in, out) == transpose of torch's (out, in)
        w = jax.random.uniform(kw, (fan_in, fan_out), jnp.float32, -bound, bound)
        b = jax.random.uniform(kb, (fan_out,), jnp.float32, -bound, bound)
        weights.append(w)
        biases.append(b)
    return weights, biases


def reference_forward(x, weights, biases, distribution):
    h = x
    n = len(weights)
    for i, (w, b) in enumerate(zip(weights, biases)):
        h = h @ w + b
        if i != n - 1:
            h = jnp.maximum(h, 0.0)
    if distribution:
        h = jax.nn.softmax(h, axis=-1)
    return h


if __name__ == "__main__":
    # network(layers=[128, 256, 256, 128], lrate=..., is_distribution=True)
    # Feature widths are multiples of 128 for MXU/lane density and lane-dense
    # (unmasked) output stores; batch 256 splits into 2x128-row tiles -> a
    # 2-step "parallel" grid so both v7x TensorCores get work and x/out DMAs
    # overlap compute.
    layers = [128, 256, 256, 128]
    B = 256

    key = jax.random.PRNGKey(0)
    key, kx = jax.random.split(key)
    x = jax.random.normal(kx, (B, layers[0]), jnp.float32)
    weights, biases = init_params(layers, key)

    # Distribution head (Softmax): torch wraps the probs in Categorical; the
    # kernel returns the probability vector (the Categorical's `probs`).
    # TODO(synk): torch.distributions.Categorical object itself has no Pallas equivalent.
    probs = jax.block_until_ready(mlp_forward(x, weights, biases, distribution=True))
    ref_p = reference_forward(x, weights, biases, True)
    assert probs.shape == (B, layers[-1])
    assert jnp.allclose(probs, ref_p, atol=1e-3, rtol=1e-3), (
        f"softmax head max err {jnp.max(jnp.abs(probs - ref_p))}"
    )

    # Plain head (is_distribution=False)
    out = jax.block_until_ready(mlp_forward(x, weights, biases, distribution=False))
    ref = reference_forward(x, weights, biases, False)
    assert out.shape == (B, layers[-1])
    assert jnp.allclose(out, ref, atol=1e-3, rtol=1e-3), (
        f"linear head max err {jnp.max(jnp.abs(out - ref))}"
    )

    print("KERNEL_OK")
</pallas_src>

<mosaic_0001>
module attributes {stable_mosaic.version = 11 : i64} {
  func.func @kernel(%arg0: i32, %arg1: memref<128x128xf32, #tpu.memory_space<vmem>>, %arg2: memref<128x256xf32, #tpu.memory_space<vmem>>, %arg3: memref<1x256xf32, #tpu.memory_space<vmem>>, %arg4: memref<256x256xf32, #tpu.memory_space<vmem>>, %arg5: memref<1x256xf32, #tpu.memory_space<vmem>>, %arg6: memref<256x128xf32, #tpu.memory_space<vmem>>, %arg7: memref<1x128xf32, #tpu.memory_space<vmem>>, %arg8: memref<128x128xf32, #tpu.memory_space<vmem>>) attributes {dimension_semantics = [#tpu.dimension_semantics<parallel>], iteration_bounds = array<i64: 2>, scalar_prefetch = 0 : i64, scratch_operands = 0 : i64, tpu.core_type = #tpu.core_type<tc>, window_params = [{transform_indices = @transform_0, window_bounds = array<i64: 128, 128>}, {pipeline_mode = #tpu.pipeline_mode<synchronous>, transform_indices = @transform_1, window_bounds = array<i64: 128, 256>}, {pipeline_mode = #tpu.pipeline_mode<synchronous>, transform_indices = @transform_2, window_bounds = array<i64: 1, 256>}, {pipeline_mode = #tpu.pipeline_mode<synchronous>, transform_indices = @transform_3, window_bounds = array<i64: 256, 256>}, {pipeline_mode = #tpu.pipeline_mode<synchronous>, transform_indices = @transform_4, window_bounds = array<i64: 1, 256>}, {pipeline_mode = #tpu.pipeline_mode<synchronous>, transform_indices = @transform_5, window_bounds = array<i64: 256, 128>}, {pipeline_mode = #tpu.pipeline_mode<synchronous>, transform_indices = @transform_6, window_bounds = array<i64: 1, 128>}, {transform_indices = @transform_7, window_bounds = array<i64: 128, 128>}]} {
    %c0 = arith.constant 0 : index
    %c0_0 = arith.constant 0 : index
    %0 = vector.load %arg1[%c0, %c0_0] : memref<128x128xf32, #tpu.memory_space<vmem>>, vector<128x128xf32>
    %c0_1 = arith.constant 0 : index
    %c0_2 = arith.constant 0 : index
    %1 = vector.load %arg2[%c0_1, %c0_2] : memref<128x256xf32, #tpu.memory_space<vmem>>, vector<128x256xf32>
    %c0_3 = arith.constant 0 : index
    %c0_4 = arith.constant 0 : index
    %2 = vector.load %arg3[%c0_3, %c0_4] : memref<1x256xf32, #tpu.memory_space<vmem>>, vector<1x256xf32>
    %cst = arith.constant dense<0.000000e+00> : vector<128x256xf32>
    %3 = tpu.matmul %0, %1, %cst {dimension_numbers = #tpu.dot_dimension_numbers<[1], [0], [0], [1], [0, 0, 1, 1], [], []>} : vector<128x128xf32>, vector<128x256xf32>, vector<128x256xf32> -> vector<128x256xf32>
    %4 = vector.broadcast %2 : vector<1x256xf32> to vector<128x256xf32>
    %5 = arith.addf %3, %4 : vector<128x256xf32>
    %cst_5 = arith.constant 0.000000e+00 : f32
    %6 = vector.broadcast %cst_5 : f32 to vector<128x256xf32>
    %7 = arith.maximumf %5, %6 : vector<128x256xf32>
    %c0_6 = arith.constant 0 : index
    %c0_7 = arith.constant 0 : index
    %8 = vector.load %arg4[%c0_6, %c0_7] : memref<256x256xf32, #tpu.memory_space<vmem>>, vector<256x256xf32>
    %c0_8 = arith.constant 0 : index
    %c0_9 = arith.constant 0 : index
    %9 = vector.load %arg5[%c0_8, %c0_9] : memref<1x256xf32, #tpu.memory_space<vmem>>, vector<1x256xf32>
    %cst_10 = arith.constant dense<0.000000e+00> : vector<128x256xf32>
    %10 = tpu.matmul %7, %8, %cst_10 {dimension_numbers = #tpu.dot_dimension_numbers<[1], [0], [0], [1], [0, 0, 1, 1], [], []>} : vector<128x256xf32>, vector<256x256xf32>, vector<128x256xf32> -> vector<128x256xf32>
    %11 = vector.broadcast %9 : vector<1x256xf32> to vector<128x256xf32>
    %12 = arith.addf %10, %11 : vector<128x256xf32>
    %cst_11 = arith.constant 0.000000e+00 : f32
    %13 = vector.broadcast %cst_11 : f32 to vector<128x256xf32>
    %14 = arith.maximumf %12, %13 : vector<128x256xf32>
    %c0_12 = arith.constant 0 : index
    %c0_13 = arith.constant 0 : index
    %15 = vector.load %arg6[%c0_12, %c0_13] : memref<256x128xf32, #tpu.memory_space<vmem>>, vector<256x128xf32>
    %c0_14 = arith.constant 0 : index
    %c0_15 = arith.constant 0 : index
    %16 = vector.load %arg7[%c0_14, %c0_15] : memref<1x128xf32, #tpu.memory_space<vmem>>, vector<1x128xf32>
    %cst_16 = arith.constant dense<0.000000e+00> : vector<128x128xf32>
    %17 = tpu.matmul %14, %15, %cst_16 {dimension_numbers = #tpu.dot_dimension_numbers<[1], [0], [0], [1], [0, 0, 1, 1], [], []>} : vector<128x256xf32>, vector<256x128xf32>, vector<128x128xf32> -> vector<128x128xf32>
    %18 = vector.broadcast %16 : vector<1x128xf32> to vector<128x128xf32>
    %19 = arith.addf %17, %18 : vector<128x128xf32>
    %cst_17 = arith.constant dense<0xFF800000> : vector<128xf32>
    %20 = vector.multi_reduction <maximumf>, %19, %cst_17 [1] : vector<128x128xf32> to vector<128xf32>
    %21 = vector.shape_cast %20 : vector<128xf32> to vector<128x1xf32>
    %22 = vector.broadcast %21 : vector<128x1xf32> to vector<128x128xf32>
    %23 = arith.subf %19, %22 : vector<128x128xf32>
    %24 = math.exp %23 : vector<128x128xf32>
    %cst_18 = arith.constant dense<0.000000e+00> : vector<128xf32>
    %25 = vector.multi_reduction <add>, %24, %cst_18 [1] : vector<128x128xf32> to vector<128xf32>
    %26 = vector.shape_cast %25 : vector<128xf32> to vector<128x1xf32>
    %27 = tpu.reciprocal %26 {approx = true} : vector<128x1xf32> -> vector<128x1xf32>
    %28 = vector.broadcast %27 : vector<128x1xf32> to vector<128x128xf32>
    %29 = arith.mulf %24, %28 : vector<128x128xf32>
    %c0_19 = arith.constant 0 : index
    %c0_20 = arith.constant 0 : index
    %30 = vector.load %arg8[%c0_19, %c0_20] : memref<128x128xf32, #tpu.memory_space<vmem>>, vector<128x128xf32>
    tpu.vector_store %arg8[%c0_19, %c0_20], %29 {strides = array<i32>} : memref<128x128xf32, #tpu.memory_space<vmem>>, vector<128x128xf32>,
    return
  }
  func.func @transform_0(%arg0: i32) -> (i32, i32) {
    %c0_i32 = arith.constant 0 : i32
    %c0_i32_0 = arith.constant 0 : i32
    return %arg0, %c0_i32 : i32, i32
  }
  func.func @transform_1(%arg0: i32) -> (i32, i32) {
    %c0_i32 = arith.constant 0 : i32
    %c0_i32_0 = arith.constant 0 : i32
    %c0_i32_1 = arith.constant 0 : i32
    return %c0_i32, %c0_i32_0 : i32, i32
  }
  func.func @transform_2(%arg0: i32) -> (i32, i32) {
    %c0_i32 = arith.constant 0 : i32
    %c0_i32_0 = arith.constant 0 : i32
    %c0_i32_1 = arith.constant 0 : i32
    return %c0_i32, %c0_i32_0 : i32, i32
  }
  func.func @transform_3(%arg0: i32) -> (i32, i32) {
    %c0_i32 = arith.constant 0 : i32
    %c0_i32_0 = arith.constant 0 : i32
    %c0_i32_1 = arith.constant 0 : i32
    return %c0_i32, %c0_i32_0 : i32, i32
  }
  func.func @transform_4(%arg0: i32) -> (i32, i32) {
    %c0_i32 = arith.constant 0 : i32
    %c0_i32_0 = arith.constant 0 : i32
    %c0_i32_1 = arith.constant 0 : i32
    return %c0_i32, %c0_i32_0 : i32, i32
  }
  func.func @transform_5(%arg0: i32) -> (i32, i32) {
    %c0_i32 = arith.constant 0 : i32
    %c0_i32_0 = arith.constant 0 : i32
    %c0_i32_1 = arith.constant 0 : i32
    return %c0_i32, %c0_i32_0 : i32, i32
  }
  func.func @transform_6(%arg0: i32) -> (i32, i32) {
    %c0_i32 = arith.constant 0 : i32
    %c0_i32_0 = arith.constant 0 : i32
    %c0_i32_1 = arith.constant 0 : i32
    return %c0_i32, %c0_i32_0 : i32, i32
  }
  func.func @transform_7(%arg0: i32) -> (i32, i32) {
    %c0_i32 = arith.constant 0 : i32
    %c0_i32_0 = arith.constant 0 : i32
    return %arg0, %c0_i32 : i32, i32
  }
}

module attributes {stable_mosaic.version = 11 : i64} {
  func.func @kernel(%arg0: i32, %arg1: memref<128x128xf32, #tpu.memory_space<vmem>>, %arg2: memref<128x256xf32, #tpu.memory_space<vmem>>, %arg3: memref<1x256xf32, #tpu.memory_space<vmem>>, %arg4: memref<256x256xf32, #tpu.memory_space<vmem>>, %arg5: memref<1x256xf32, #tpu.memory_space<vmem>>, %arg6: memref<256x128xf32, #tpu.memory_space<vmem>>, %arg7: memref<1x128xf32, #tpu.memory_space<vmem>>, %arg8: memref<128x128xf32, #tpu.memory_space<vmem>>) attributes {dimension_semantics = [#tpu.dimension_semantics<parallel>], iteration_bounds = array<i64: 2>, scalar_prefetch = 0 : i64, scratch_operands = 0 : i64, tpu.core_type = #tpu.core_type<tc>, window_params = [{transform_indices = @transform_0, window_bounds = array<i64: 128, 128>}, {pipeline_mode = #tpu.pipeline_mode<synchronous>, transform_indices = @transform_1, window_bounds = array<i64: 128, 256>}, {pipeline_mode = #tpu.pipeline_mode<synchronous>, transform_indices = @transform_2, window_bounds = array<i64: 1, 256>}, {pipeline_mode = #tpu.pipeline_mode<synchronous>, transform_indices = @transform_3, window_bounds = array<i64: 256, 256>}, {pipeline_mode = #tpu.pipeline_mode<synchronous>, transform_indices = @transform_4, window_bounds = array<i64: 1, 256>}, {pipeline_mode = #tpu.pipeline_mode<synchronous>, transform_indices = @transform_5, window_bounds = array<i64: 256, 128>}, {pipeline_mode = #tpu.pipeline_mode<synchronous>, transform_indices = @transform_6, window_bounds = array<i64: 1, 128>}, {transform_indices = @transform_7, window_bounds = array<i64: 128, 128>}]} {
    %c0 = arith.constant 0 : index
    %c0_0 = arith.constant 0 : index
    %0 = vector.load %arg1[%c0, %c0_0] : memref<128x128xf32, #tpu.memory_space<vmem>>, vector<128x128xf32>
    %c0_1 = arith.constant 0 : index
    %c0_2 = arith.constant 0 : index
    %1 = vector.load %arg2[%c0_1, %c0_2] : memref<128x256xf32, #tpu.memory_space<vmem>>, vector<128x256xf32>
    %c0_3 = arith.constant 0 : index
    %c0_4 = arith.constant 0 : index
    %2 = vector.load %arg3[%c0_3, %c0_4] : memref<1x256xf32, #tpu.memory_space<vmem>>, vector<1x256xf32>
    %cst = arith.constant dense<0.000000e+00> : vector<128x256xf32>
    %3 = tpu.matmul %0, %1, %cst {dimension_numbers = #tpu.dot_dimension_numbers<[1], [0], [0], [1], [0, 0, 1, 1], [], []>} : vector<128x128xf32>, vector<128x256xf32>, vector<128x256xf32> -> vector<128x256xf32>
    %4 = vector.broadcast %2 : vector<1x256xf32> to vector<128x256xf32>
    %5 = arith.addf %3, %4 : vector<128x256xf32>
    %cst_5 = arith.constant 0.000000e+00 : f32
    %6 = vector.broadcast %cst_5 : f32 to vector<128x256xf32>
    %7 = arith.maximumf %5, %6 : vector<128x256xf32>
    %c0_6 = arith.constant 0 : index
    %c0_7 = arith.constant 0 : index
    %8 = vector.load %arg4[%c0_6, %c0_7] : memref<256x256xf32, #tpu.memory_space<vmem>>, vector<256x256xf32>
    %c0_8 = arith.constant 0 : index
    %c0_9 = arith.constant 0 : index
    %9 = vector.load %arg5[%c0_8, %c0_9] : memref<1x256xf32, #tpu.memory_space<vmem>>, vector<1x256xf32>
    %cst_10 = arith.constant dense<0.000000e+00> : vector<128x256xf32>
    %10 = tpu.matmul %7, %8, %cst_10 {dimension_numbers = #tpu.dot_dimension_numbers<[1], [0], [0], [1], [0, 0, 1, 1], [], []>} : vector<128x256xf32>, vector<256x256xf32>, vector<128x256xf32> -> vector<128x256xf32>
    %11 = vector.broadcast %9 : vector<1x256xf32> to vector<128x256xf32>
    %12 = arith.addf %10, %11 : vector<128x256xf32>
    %cst_11 = arith.constant 0.000000e+00 : f32
    %13 = vector.broadcast %cst_11 : f32 to vector<128x256xf32>
    %14 = arith.maximumf %12, %13 : vector<128x256xf32>
    %c0_12 = arith.constant 0 : index
    %c0_13 = arith.constant 0 : index
    %15 = vector.load %arg6[%c0_12, %c0_13] : memref<256x128xf32, #tpu.memory_space<vmem>>, vector<256x128xf32>
    %c0_14 = arith.constant 0 : index
    %c0_15 = arith.constant 0 : index
    %16 = vector.load %arg7[%c0_14, %c0_15] : memref<1x128xf32, #tpu.memory_space<vmem>>, vector<1x128xf32>
    %cst_16 = arith.constant dense<0.000000e+00> : vector<128x128xf32>
    %17 = tpu.matmul %14, %15, %cst_16 {dimension_numbers = #tpu.dot_dimension_numbers<[1], [0], [0], [1], [0, 0, 1, 1], [], []>} : vector<128x256xf32>, vector<256x128xf32>, vector<128x128xf32> -> vector<128x128xf32>
    %18 = vector.broadcast %16 : vector<1x128xf32> to vector<128x128xf32>
    %19 = arith.addf %17, %18 : vector<128x128xf32>
    %cst_17 = arith.constant dense<0xFF800000> : vector<128xf32>
    %20 = vector.multi_reduction <maximumf>, %19, %cst_17 [1] : vector<128x128xf32> to vector<128xf32>
    %21 = vector.shape_cast %20 : vector<128xf32> to vector<128x1xf32>
    %22 = vector.broadcast %21 : vector<128x1xf32> to vector<128x128xf32>
    %23 = arith.subf %19, %22 : vector<128x128xf32>
    %24 = math.exp %23 : vector<128x128xf32>
    %cst_18 = arith.constant dense<0.000000e+00> : vector<128xf32>
    %25 = vector.multi_reduction <add>, %24, %cst_18 [1] : vector<128x128xf32> to vector<128xf32>
    %26 = vector.shape_cast %25 : vector<128xf32> to vector<128x1xf32>
    %27 = tpu.reciprocal %26 {approx = true} : vector<128x1xf32> -> vector<128x1xf32>
    %28 = vector.broadcast %27 : vector<128x1xf32> to vector<128x128xf32>
    %29 = arith.mulf %24, %28 : vector<128x128xf32>
    %c0_19 = arith.constant 0 : index
    %c0_20 = arith.constant 0 : index
    %30 = vector.load %arg8[%c0_19, %c0_20] : memref<128x128xf32, #tpu.memory_space<vmem>>, vector<128x128xf32>
    tpu.vector_store %arg8[%c0_19, %c0_20], %29 {strides = array<i32>} : memref<128x128xf32, #tpu.memory_space<vmem>>, vector<128x128xf32>,
    return
  }
  func.func @transform_0(%arg0: i32) -> (i32, i32) {
    %c0_i32 = arith.constant 0 : i32
    %c0_i32_0 = arith.constant 0 : i32
    return %arg0, %c0_i32 : i32, i32
  }
  func.func @transform_1(%arg0: i32) -> (i32, i32) {
    %c0_i32 = arith.constant 0 : i32
    %c0_i32_0 = arith.constant 0 : i32
    %c0_i32_1 = arith.constant 0 : i32
    return %c0_i32, %c0_i32_0 : i32, i32
  }
  func.func @transform_2(%arg0: i32) -> (i32, i32) {
    %c0_i32 = arith.constant 0 : i32
    %c0_i32_0 = arith.constant 0 : i32
    %c0_i32_1 = arith.constant 0 : i32
    return %c0_i32, %c0_i32_0 : i32, i32
  }
  func.func @transform_3(%arg0: i32) -> (i32, i32) {
    %c0_i32 = arith.constant 0 : i32
    %c0_i32_0 = arith.constant 0 : i32
    %c0_i32_1 = arith.constant 0 : i32
    return %c0_i32, %c0_i32_0 : i32, i32
  }
  func.func @transform_4(%arg0: i32) -> (i32, i32) {
    %c0_i32 = arith.constant 0 : i32
    %c0_i32_0 = arith.constant 0 : i32
    %c0_i32_1 = arith.constant 0 : i32
    return %c0_i32, %c0_i32_0 : i32, i32
  }
  func.func @transform_5(%arg0: i32) -> (i32, i32) {
    %c0_i32 = arith.constant 0 : i32
    %c0_i32_0 = arith.constant 0 : i32
    %c0_i32_1 = arith.constant 0 : i32
    return %c0_i32, %c0_i32_0 : i32, i32
  }
  func.func @transform_6(%arg0: i32) -> (i32, i32) {
    %c0_i32 = arith.constant 0 : i32
    %c0_i32_0 = arith.constant 0 : i32
    %c0_i32_1 = arith.constant 0 : i32
    return %c0_i32, %c0_i32_0 : i32, i32
  }
  func.func @transform_7(%arg0: i32) -> (i32, i32) {
    %c0_i32 = arith.constant 0 : i32
    %c0_i32_0 = arith.constant 0 : i32
    return %arg0, %c0_i32 : i32, i32
  }
}

</mosaic_0001>

<llo_original>
// kernel: tpu_custom_call.1
$region0: #{tpu_custom_call.1}
  #allocation0 [shape = 'u32[]', space=smem, size = 0x4, offset = 0x4, fixed_abs, tag = 'smem constant byte address 0x4 - core index']
  #allocation1 [shape = 'u32[144,128]{1,0:T(1,128)}', space=vmem, size = 0x12000, scoped, tag = 'internal scratch']
  %s0 = inlined_call_operand.hbm [shape: f32[256,128], index: 0, kind: input, shape index: {}]
  %s1 = inlined_call_operand.hbm [shape: f32[128,256], index: 1, kind: input, shape index: {}]
  %s2 = inlined_call_operand.vmem [shape: f32[1,256], index: 2, kind: input, shape index: {}]
  %s3 = inlined_call_operand.hbm [shape: f32[256,256], index: 3, kind: input, shape index: {}]
  %s4 = inlined_call_operand.vmem [shape: f32[1,256], index: 4, kind: input, shape index: {}]
  %s5 = inlined_call_operand.hbm [shape: f32[256,128], index: 5, kind: input, shape index: {}]
  %s6 = inlined_call_operand.vmem [shape: f32[1,128], index: 6, kind: input, shape index: {}]
  %s7 = inlined_call_operand.hbm [shape: f32[256,128], index: 7, kind: output, shape index: {}]
  %s8 = sld [smem:[#allocation0]]
  $region77: #{tpu_custom_call.1} parent=0
    _
  %s10 = ssub.s32 1, %s8
  %s11 = scalar_select 0, %s10, %s8
  $region1: #{tpu_custom_call.1} parent=0
    #allocation2 [shape = 'u8[131072]{0}', space=vmem, size = 0x20000, scoped, tag = 'input window, operand 0']
    #allocation3 [shape = 's32[2]{0}', space=sflag, size = 0x8, scoped, tag = 'scoped memory for tpu_custom_call.1']
    #allocation4 [shape = 's32[2]{0}', space=sflag, size = 0x8, scoped, tag = 'scoped memory for tpu_custom_call.1']
    #allocation5 [shape = 'u8[131072]{0}', space=vmem, size = 0x20000, scoped, tag = 'input window, operand 1, single buffered']
    #allocation6 [shape = 's32[1]{0}', space=sflag, size = 0x4, scoped, tag = 'scoped memory for tpu_custom_call.1']
    #allocation7 [shape = 'u8[262144]{0}', space=vmem, size = 0x40000, scoped, tag = 'input window, operand 3, single buffered']
    #allocation8 [shape = 'u8[131072]{0}', space=vmem, size = 0x20000, scoped, tag = 'input window, operand 5, single buffered']
    #allocation9 [shape = 's32[1]{0}', space=sflag, size = 0x4, scoped, tag = 'scoped memory for tpu_custom_call.1']
    #allocation10 [shape = 'u8[131072]{0}', space=vmem, size = 0x20000, scoped, tag = 'output window, operand 0']
    %12 = vsyncpa [#allocation3], 0
    %s13 = scalar_lea.sflag [#allocation3], 1
    %14 = vsyncpa %s13, 0
    %15 = vsyncpa [#allocation6], 0
    %16 = vsyncpa [#allocation9], 0
    %17 = vsyncpa [#allocation4], 0
    %s18 = scalar_lea.sflag [#allocation4], 1
    %19 = vsyncpa %s18, 0
    loop: start=0, step=1, limit=4
    $region2: #{tpu_custom_call.1} parent=1 // loop_pre_header
      _
    $region3: #{tpu_custom_call.1} parent=1 // loop_header
      %s21 = sphi 0, %s25
      %p22 = scmp.ge.s32.totalorder %s21, 4
      %s31 = sphi 0, %s33
      %s34 = sphi 0, %s31
      %s35 = sphi 0, %s34
      %s51 = sphi 0, %s35
      %s55 = sphi 0, %s55
      %s57 = sphi 0, %s55
      %s58 = sphi 0, %s57
      %s72 = sphi 0, %s58
      %s76 = sphi 0, %s76
      %s78 = sphi 0, %s76
      %s79 = sphi 0, %s78
      %s93 = sphi 0, %s79
      %s97 = sphi 0, %s97
      %s99 = sphi 0, %s97
      %s100 = sphi 0, %s99
      %s114 = sphi 0, %s100
      %s118 = sphi 0, %s118
      %s120 = sphi 0, %s118
      %s121 = sphi 0, %s120
      %s135 = sphi 0, %s121
      %s139 = sphi 0, %s139
      %s141 = sphi 0, %s139
      %s142 = sphi 0, %s141
      %s156 = sphi 0, %s142
      %s160 = sphi 0, %s160
      %s162 = sphi 0, %s160
      %s163 = sphi 0, %s162
      %s177 = sphi 0, %s163
      %s183 = sphi 0, %s185
      %s186 = sphi 0, %s183
      %s187 = sphi 0, %s186
      %s203 = sphi 0, %s187
    $region4: #{tpu_custom_call.1} parent=1 // loop_header_branch
      %24 = sbr.rel (%p22) target = $region8
    $region5: #{tpu_custom_call.1} parent=1 // loop_body
      %s26 = ssub.s32 %s21, 1
      %s27 = ssub.s32 %s21, 2
      %s28 = sadd.s32 %s21, 1
      %s29 = ssub.s32 %s21, %s28
      %p30 = scmp.eq.s32.totalorder %s29, 0
      %s32 = sadd.s32 %s31, 1
      %s33 = scalar_select %p30, %s31, %s32
      %p36 = pneg %p30
      %p37 = scmp.eq.s32.totalorder %s21, 1
      %p38 = por %p36, %p37
      %p39 = scmp.ne.s32.totalorder %s31, %s34
      %p40 = scmp.eq.s32.totalorder %s21, 0
      %p41 = por %p39, %p40
      %p42 = scmp.ne.s32.totalorder %s31, %s34
      %p43 = scmp.eq.s32.totalorder %s26, 1
      %p44 = por %p42, %p43
      %p45 = scmp.ne.s32.totalorder %s34, %s35
      %p46 = scmp.eq.s32.totalorder %s26, 0
      %p47 = por %p45, %p46
      %p48 = scmp.ne.s32.totalorder %s34, %s35
      %p49 = scmp.eq.s32.totalorder %s27, 1
      %p50 = por %p48, %p49
      %p52 = scmp.ne.s32.totalorder %s35, %s51
      %p53 = scmp.eq.s32.totalorder %s27, 0
      %p54 = por %p52, %p53
      %s56 = sadd.s32 %s55, 1
      %p59 = scmp.eq.s32.totalorder %s21, 1
      %p60 = scmp.ne.s32.totalorder %s55, %s57
      %p61 = scmp.eq.s32.totalorder %s21, 0
      %p62 = por %p60, %p61
      %p63 = scmp.ne.s32.totalorder %s55, %s57
      %p64 = scmp.eq.s32.totalorder %s26, 1
      %p65 = por %p63, %p64
      %p66 = scmp.ne.s32.totalorder %s57, %s58
      %p67 = scmp.eq.s32.totalorder %s26, 0
      %p68 = por %p66, %p67
      %p69 = scmp.ne.s32.totalorder %s57, %s58
      %p70 = scmp.eq.s32.totalorder %s27, 1
      %p71 = por %p69, %p70
      %p73 = scmp.ne.s32.totalorder %s58, %s72
      %p74 = scmp.eq.s32.totalorder %s27, 0
      %p75 = por %p73, %p74
      %s77 = sadd.s32 %s76, 1
      %p80 = scmp.eq.s32.totalorder %s21, 1
      %p81 = scmp.ne.s32.totalorder %s76, %s78
      %p82 = scmp.eq.s32.totalorder %s21, 0
      %p83 = por %p81, %p82
      %p84 = scmp.ne.s32.totalorder %s76, %s78
      %p85 = scmp.eq.s32.totalorder %s26, 1
      %p86 = por %p84, %p85
      %p87 = scmp.ne.s32.totalorder %s78, %s79
      %p88 = scmp.eq.s32.totalorder %s26, 0
      %p89 = por %p87, %p88
      %p90 = scmp.ne.s32.totalorder %s78, %s79
      %p91 = scmp.eq.s32.totalorder %s27, 1
      %p92 = por %p90, %p91
      %p94 = scmp.ne.s32.totalorder %s79, %s93
      %p95 = scmp.eq.s32.totalorder %s27, 0
      %p96 = por %p94, %p95
      %s98 = sadd.s32 %s97, 1
      %p101 = scmp.eq.s32.totalorder %s21, 1
      %p102 = scmp.ne.s32.totalorder %s97, %s99
      %p103 = scmp.eq.s32.totalorder %s21, 0
      %p104 = por %p102, %p103
      %p105 = scmp.ne.s32.totalorder %s97, %s99
      %p106 = scmp.eq.s32.totalorder %s26, 1
      %p107 = por %p105, %p106
      %p108 = scmp.ne.s32.totalorder %s99, %s100
      %p109 = scmp.eq.s32.totalorder %s26, 0
      %p110 = por %p108, %p109
      %p111 = scmp.ne.s32.totalorder %s99, %s100
      %p112 = scmp.eq.s32.totalorder %s27, 1
      %p113 = por %p111, %p112
      %p115 = scmp.ne.s32.totalorder %s100, %s114
      %p116 = scmp.eq.s32.totalorder %s27, 0
      %p117 = por %p115, %p116
      %s119 = sadd.s32 %s118, 1
      %p122 = scmp.eq.s32.totalorder %s21, 1
      %p123 = scmp.ne.s32.totalorder %s118, %s120
      %p124 = scmp.eq.s32.totalorder %s21, 0
      %p125 = por %p123, %p124
      %p126 = scmp.ne.s32.totalorder %s118, %s120
      %p127 = scmp.eq.s32.totalorder %s26, 1
      %p128 = por %p126, %p127
      %p129 = scmp.ne.s32.totalorder %s120, %s121
      %p130 = scmp.eq.s32.totalorder %s26, 0
      %p131 = por %p129, %p130
      %p132 = scmp.ne.s32.totalorder %s120, %s121
      %p133 = scmp.eq.s32.totalorder %s27, 1
      %p134 = por %p132, %p133
      %p136 = scmp.ne.s32.totalorder %s121, %s135
      %p137 = scmp.eq.s32.totalorder %s27, 0
      %p138 = por %p136, %p137
      %s140 = sadd.s32 %s139, 1
      %p143 = scmp.eq.s32.totalorder %s21, 1
      %p144 = scmp.ne.s32.totalorder %s139, %s141
      %p145 = scmp.eq.s32.totalorder %s21, 0
      %p146 = por %p144, %p145
      %p147 = scmp.ne.s32.totalorder %s139, %s141
      %p148 = scmp.eq.s32.totalorder %s26, 1
      %p149 = por %p147, %p148
      %p150 = scmp.ne.s32.totalorder %s141, %s142
      %p151 = scmp.eq.s32.totalorder %s26, 0
      %p152 = por %p150, %p151
      %p153 = scmp.ne.s32.totalorder %s141, %s142
      %p154 = scmp.eq.s32.totalorder %s27, 1
      %p155 = por %p153, %p154
      %p157 = scmp.ne.s32.totalorder %s142, %s156
      %p158 = scmp.eq.s32.totalorder %s27, 0
      %p159 = por %p157, %p158
      %s161 = sadd.s32 %s160, 1
      %p164 = scmp.eq.s32.totalorder %s21, 1
      %p165 = scmp.ne.s32.totalorder %s160, %s162
      %p166 = scmp.eq.s32.totalorder %s21, 0
      %p167 = por %p165, %p166
      %p168 = scmp.ne.s32.totalorder %s160, %s162
      %p169 = scmp.eq.s32.totalorder %s26, 1
      %p170 = por %p168, %p169
      %p171 = scmp.ne.s32.totalorder %s162, %s163
      %p172 = scmp.eq.s32.totalorder %s26, 0
      %p173 = por %p171, %p172
      %p174 = scmp.ne.s32.totalorder %s162, %s163
      %p175 = scmp.eq.s32.totalorder %s27, 1
      %p176 = por %p174, %p175
      %p178 = scmp.ne.s32.totalorder %s163, %s177
      %p179 = scmp.eq.s32.totalorder %s27, 0
      %p180 = por %p178, %p179
      %s181 = ssub.s32 %s21, %s28
      %p182 = scmp.eq.s32.totalorder %s181, 0
      %s184 = sadd.s32 %s183, 1
      %s185 = scalar_select %p182, %s183, %s184
      %p188 = pneg %p182
      %p189 = scmp.eq.s32.totalorder %s21, 1
      %p190 = por %p188, %p189
      %p191 = scmp.ne.s32.totalorder %s183, %s186
      %p192 = scmp.eq.s32.totalorder %s21, 0
      %p193 = por %p191, %p192
      %p194 = scmp.ne.s32.totalorder %s183, %s186
      %p195 = scmp.eq.s32.totalorder %s26, 1
      %p196 = por %p194, %p195
      %p197 = scmp.ne.s32.totalorder %s186, %s187
      %p198 = scmp.eq.s32.totalorder %s26, 0
      %p199 = por %p197, %p198
      %p200 = scmp.ne.s32.totalorder %s186, %s187
      %p201 = scmp.eq.s32.totalorder %s27, 1
      %p202 = por %p200, %p201
      %p204 = scmp.ne.s32.totalorder %s187, %s203
      %p205 = scmp.eq.s32.totalorder %s27, 0
      %p206 = por %p204, %p205
      %p207 = scmp.le.s32.totalorder 1, %s21
      %p208 = scmp.lt.s32.totalorder %s21, 3
      %p209 = pnand %p207, %p208
      %p210 = pneg %p209
      // Predicated region
      $region9: #{tpu_custom_call.1} parent=5 // pred_check
        _
      $region10: #{tpu_custom_call.1} parent=5 // pred_check_branch
        %212 = sbr.rel (%p209) target = $region12
      $region11: #{tpu_custom_call.1} parent=5 // pred_region
        %s213 = ssub.s32 %s21, 1
        // Predicated region
        $region13: #{tpu_custom_call.1} parent=11 // pred_check
          %p214 = pneg %p68
        $region14: #{tpu_custom_call.1} parent=11 // pred_check_branch
          %216 = sbr.rel (%p214) target = $region16
        $region15: #{tpu_custom_call.1} parent=11 // pred_region
          %s218 = ssub.s32 4096, 4096
          %219 = vsyncadd [#allocation6], %s218
          %s220 = sshll.u32 [#allocation5], 4
          %s221 = int_to_ptr.vmem [resolvable:$true] %s220
          %226 = dma.hbm_to_vmem [thread:$0]  %s1, 4096, %s221, [#allocation6], 256, 256, 16
        $region16: #{tpu_custom_call.1} parent=11 // pred_fallthru
          _
        // Predicated region
        $region17: #{tpu_custom_call.1} parent=11 // pred_check
          %p227 = pneg %p89
        $region18: #{tpu_custom_call.1} parent=11 // pred_check_branch
          %229 = sbr.rel (%p227) target = $region20
        $region19: #{tpu_custom_call.1} parent=11 // pred_region
          _
        $region20: #{tpu_custom_call.1} parent=11 // pred_fallthru
          _
        // Predicated region
        $region21: #{tpu_custom_call.1} parent=11 // pred_check
          %p230 = pneg %p110
        $region22: #{tpu_custom_call.1} parent=11 // pred_check_branch
          %232 = sbr.rel (%p230) target = $region24
        $region23: #{tpu_custom_call.1} parent=11 // pred_region
          %s234 = ssub.s32 8192, 8192
          %235 = vsyncadd [#allocation6], %s234
          %s236 = sshll.u32 [#allocation7], 4
          %s237 = int_to_ptr.vmem [resolvable:$true] %s236
          %242 = dma.hbm_to_vmem [thread:$0]  %s3, 8192, %s237, [#allocation6], 256, 256, 16
        $region24: #{tpu_custom_call.1} parent=11 // pred_fallthru
          _
        // Predicated region
        $region25: #{tpu_custom_call.1} parent=11 // pred_check
          %p243 = pneg %p131
        $region26: #{tpu_custom_call.1} parent=11 // pred_check_branch
          %245 = sbr.rel (%p243) target = $region28
        $region27: #{tpu_custom_call.1} parent=11 // pred_region
          _
        $region28: #{tpu_custom_call.1} parent=11 // pred_fallthru
          _
        // Predicated region
        $region29: #{tpu_custom_call.1} parent=11 // pred_check
          %p246 = pneg %p152
        $region30: #{tpu_custom_call.1} parent=11 // pred_check_branch
          %248 = sbr.rel (%p246) target = $region32
        $region31: #{tpu_custom_call.1} parent=11 // pred_region
          %s250 = ssub.s32 4096, 4096
          %251 = vsyncadd [#allocation9], %s250
          %s252 = sshll.u32 [#allocation8], 4
          %s253 = int_to_ptr.vmem [resolvable:$true] %s252
          %258 = dma.hbm_to_vmem [thread:$0]  %s5, 4096, %s253, [#allocation9], 128, 128, 8
        $region32: #{tpu_custom_call.1} parent=11 // pred_fallthru
          _
        // Predicated region
        $region33: #{tpu_custom_call.1} parent=11 // pred_check
          %p259 = pneg %p173
        $region34: #{tpu_custom_call.1} parent=11 // pred_check_branch
          %261 = sbr.rel (%p259) target = $region36
        $region35: #{tpu_custom_call.1} parent=11 // pred_region
          _
        $region36: #{tpu_custom_call.1} parent=11 // pred_fallthru
          _
      $region12: #{tpu_custom_call.1} parent=5 // pred_fallthru
        _
      %p262 = scmp.lt.s32.totalorder %s21, 2
      // Predicated region
      $region37: #{tpu_custom_call.1} parent=5 // pred_check
        %p263 = pneg %p262
      $region38: #{tpu_custom_call.1} parent=5 // pred_check_branch
        %265 = sbr.rel (%p263) target = $region40
      $region39: #{tpu_custom_call.1} parent=5 // pred_region
        // Predicated region
        $region41: #{tpu_custom_call.1} parent=39 // pred_check
          %p266 = pneg %p41
        $region42: #{tpu_custom_call.1} parent=39 // pred_check_branch
          %268 = sbr.rel (%p266) target = $region44
        $region43: #{tpu_custom_call.1} parent=39 // pred_region
          %s269 = sand.u32 %s31, 1
          %s270 = scalar_lea.sflag [#allocation3], %s269
          %s271 = sand.u32 %s31, 1
          %s272 = smul.addr %s271, 128
          %s273 = scalar_lea.vmem [#allocation2], %s272
          %s274 = smul.u32 16, %s21
          %s276 = ssub.s32 2048, 2048
          %277 = vsyncadd %s270, %s276
          %s278 = smul.addr %s274, 128
          %s279 = scalar_lea.hbm %s0, %s278
          %s280 = sshll.u32 %s273, 4
          %s281 = int_to_ptr.vmem [resolvable:$true] %s280
          %286 = dma.hbm_to_vmem [thread:$0]  %s279, 2048, %s281, %s270, 128, 128, 8
        $region44: #{tpu_custom_call.1} parent=39 // pred_fallthru
          _
      $region40: #{tpu_custom_call.1} parent=5 // pred_fallthru
        _
      %p287 = scmp.le.s32.totalorder 1, %s21
      %p288 = scmp.lt.s32.totalorder %s21, 3
      %p289 = pnand %p287, %p288
      %p290 = pneg %p289
      // Predicated region
      $region45: #{tpu_custom_call.1} parent=5 // pred_check
        _
      $region46: #{tpu_custom_call.1} parent=5 // pred_check_branch
        %292 = sbr.rel (%p289) target = $region48
      $region47: #{tpu_custom_call.1} parent=5 // pred_region
        %s293 = ssub.s32 %s21, 1
        %s294 = sand.u32 %s34, 1
        %s295 = scalar_lea.sflag [#allocation3], %s294
        %s296 = sand.u32 %s34, 1
        %s297 = smul.addr %s296, 128
        %s298 = scalar_lea.vmem [#allocation2], %s297
        // Predicated region
        $region49: #{tpu_custom_call.1} parent=47 // pred_check
          %p299 = pneg %p47
        $region50: #{tpu_custom_call.1} parent=47 // pred_check_branch
          %301 = sbr.rel (%p299) target = $region52
        $region51: #{tpu_custom_call.1} parent=47 // pred_region
          %302 = dma.done %s295, 2048
        $region52: #{tpu_custom_call.1} parent=47 // pred_fallthru
          _
        // Predicated region
        $region53: #{tpu_custom_call.1} parent=47 // pred_check
          %p303 = pneg %p68
        $region54: #{tpu_custom_call.1} parent=47 // pred_check_branch
          %305 = sbr.rel (%p303) target = $region56
        $region55: #{tpu_custom_call.1} parent=47 // pred_region
          %306 = dma.done [#allocation6], 4096
        $region56: #{tpu_custom_call.1} parent=47 // pred_fallthru
          _
        // Predicated region
        $region57: #{tpu_custom_call.1} parent=47 // pred_check
          %p307 = pneg %p110
        $region58: #{tpu_custom_call.1} parent=47 // pred_check_branch
          %309 = sbr.rel (%p307) target = $region60
        $region59: #{tpu_custom_call.1} parent=47 // pred_region
          %310 = dma.done [#allocation6], 8192
        $region60: #{tpu_custom_call.1} parent=47 // pred_fallthru
          _
        // Predicated region
        $region61: #{tpu_custom_call.1} parent=47 // pred_check
          %p311 = pneg %p152
        $region62: #{tpu_custom_call.1} parent=47 // pred_check_branch
          %313 = sbr.rel (%p311) target = $region64
        $region63: #{tpu_custom_call.1} parent=47 // pred_region
          %314 = dma.done [#allocation9], 4096
        $region64: #{tpu_custom_call.1} parent=47 // pred_fallthru
          _
        %s315 = sand.u32 %s34, 1
        %s316 = scalar_lea.sflag [#allocation3], %s315
        %s317 = sand.u32 %s34, 1
        %s318 = smul.addr %s317, 128
        %s319 = scalar_lea.vmem [#allocation2], %s318
        %p320 = pneg %p47
        %p321 = pneg %p44
        %p322 = pneg %p68
        %p323 = pneg %p65
        %p324 = pneg %p89
        %p325 = pneg %p86
        %p326 = pneg %p110
        %p327 = pneg %p107
        %p328 = pneg %p131
        %p329 = pneg %p128
        %p330 = pneg %p152
        %p331 = pneg %p149
        %p332 = pneg %p173
        %p333 = pneg %p170
        %p334 = pneg %p199
        %p335 = pneg %p196
        %s336 = sand.u32 %s186, 1
        %s337 = scalar_lea.sflag [#allocation4], %s336
        %s338 = sand.u32 %s186, 1
        %s339 = smul.addr %s338, 128
        %s340 = scalar_lea.vmem [#allocation10], %s339
        %s341 = smul.u32 16, %s26
        %s342 = smul.u32 16, %s26
        %v343 = vld [vmem:[%s298] sm:$0xff]
        %v344 = vld [vmem:[%s298 + $0x8] sm:$0xff]
        %v345 = vld [vmem:[%s298 + $0x10] sm:$0xff]
        %v346 = vld [vmem:[%s298 + $0x18] sm:$0xff]
        %v347 = vld [vmem:[%s298 + $0x20] sm:$0xff]
        %v348 = vld [vmem:[%s298 + $0x28] sm:$0xff]
        %v349 = vld [vmem:[%s298 + $0x30] sm:$0xff]
        %v350 = vld [vmem:[%s298 + $0x38] sm:$0xff]
        %v351 = vld [vmem:[%s298 + $0x40] sm:$0xff]
        %v352 = vld [vmem:[%s298 + $0x48] sm:$0xff]
        %v353 = vld [vmem:[%s298 + $0x50] sm:$0xff]
        %v354 = vld [vmem:[%s298 + $0x58] sm:$0xff]
        %v355 = vld [vmem:[%s298 + $0x60] sm:$0xff]
        %v356 = vld [vmem:[%s298 + $0x68] sm:$0xff]
        %v357 = vld [vmem:[%s298 + $0x70] sm:$0xff]
        %v358 = vld [vmem:[%s298 + $0x78] sm:$0xff]
        %v359 = vld [vmem:[#allocation5] sm:$0xff]
        %v360 = vld [vmem:[#allocation5 + $0x8] sm:$0xff]
        %v361 = vld [vmem:[#allocation5 + $0x10] sm:$0xff]
        %v362 = vld [vmem:[#allocation5 + $0x18] sm:$0xff]
        %v363 = vld [vmem:[#allocation5 + $0x20] sm:$0xff]
        %v364 = vld [vmem:[#allocation5 + $0x28] sm:$0xff]
        %v365 = vld [vmem:[#allocation5 + $0x30] sm:$0xff]
        %v366 = vld [vmem:[#allocation5 + $0x38] sm:$0xff]
        %v367 = vld [vmem:[#allocation5 + $0x40] sm:$0xff]
        %v368 = vld [vmem:[#allocation5 + $0x48] sm:$0xff]
        %v369 = vld [vmem:[#allocation5 + $0x50] sm:$0xff]
        %v370 = vld [vmem:[#allocation5 + $0x58] sm:$0xff]
        %v371 = vld [vmem:[#allocation5 + $0x60] sm:$0xff]
        %v372 = vld [vmem:[#allocation5 + $0x68] sm:$0xff]
        %v373 = vld [vmem:[#allocation5 + $0x70] sm:$0xff]
        %v374 = vld [vmem:[#allocation5 + $0x78] sm:$0xff]
        %v375 = vld [vmem:[#allocation5 + $0x80] sm:$0xff]
        %v376 = vld [vmem:[#allocation5 + $0x88] sm:$0xff]
        %v377 = vld [vmem:[#allocation5 + $0x90] sm:$0xff]
        %v378 = vld [vmem:[#allocation5 + $0x98] sm:$0xff]
        %v379 = vld [vmem:[#allocation5 + $0xa0] sm:$0xff]
        %v380 = vld [vmem:[#allocation5 + $0xa8] sm:$0xff]
        %v381 = vld [vmem:[#allocation5 + $0xb0] sm:$0xff]
        %v382 = vld [vmem:[#allocation5 + $0xb8] sm:$0xff]
        %v383 = vld [vmem:[#allocation5 + $0xc0] sm:$0xff]
        %v384 = vld [vmem:[#allocation5 + $0xc8] sm:$0xff]
        %v385 = vld [vmem:[#allocation5 + $0xd0] sm:$0xff]
        %v386 = vld [vmem:[#allocation5 + $0xd8] sm:$0xff]
        %v387 = vld [vmem:[#allocation5 + $0xe0] sm:$0xff]
        %v388 = vld [vmem:[#allocation5 + $0xe8] sm:$0xff]
        %v389 = vld [vmem:[#allocation5 + $0xf0] sm:$0xff]
        %v390 = vld [vmem:[#allocation5 + $0xf8] sm:$0xff]
        %v391 = vld [vmem:[%s2] sm:$0x3]
        %v393 = vlaneseq
        %v394 = vshrl.u32 %v393, 7
        %v395 = vsub.s32 0, %v394
        %v396 = vrot.slane %v391, %v395
        %v397 = vlaneseq
        %v398 = vshrl.u32 %v397, 7
        %v399 = vsub.s32 1, %v398
        %v400 = vrot.slane %v391, %v399
        %403 = vmatprep.subr.mxu0 %v390
        %404 = vmatpush1.msra.mxu0 %v389
        %405 = vmatprep.subr.mxu0 %v388
        %406 = vmatpush1.msra.mxu0 %v387
        %407 = vmatprep.subr.mxu0 %v386
        %408 = vmatpush1.msra.mxu0 %v385
        %409 = vmatprep.subr.mxu0 %v384
        %410 = vmatpush1.msra.mxu0 %v383
        %411 = vmatprep.subr.mxu0 %v382
        %412 = vmatpush1.msra.mxu0 %v381
        %413 = vmatprep.subr.mxu0 %v380
        %414 = vmatpush1.msra.mxu0 %v379
        %415 = vmatprep.subr.mxu0 %v378
        %416 = vmatpush1.msra.mxu0 %v377
        %417 = vmatprep.subr.mxu0 %v376
        %418 = vmatpush1.msra.mxu0 %v375
        %419 = vmatprep.subr.mxu0 %v374
        %420 = vmatpush1.msra.mxu0 %v373
        %421 = vmatprep.subr.mxu0 %v372
        %422 = vmatpush1.msra.mxu0 %v371
        %423 = vmatprep.subr.mxu0 %v370
        %424 = vmatpush1.msra.mxu0 %v369
        %425 = vmatprep.subr.mxu0 %v368
        %426 = vmatpush1.msra.mxu0 %v367
        %427 = vmatprep.subr.mxu0 %v366
        %428 = vmatpush1.msra.mxu0 %v365
        %429 = vmatprep.subr.mxu0 %v364
        %430 = vmatpush1.msra.mxu0 %v363
        %431 = vmatprep.subr.mxu0 %v362
        %432 = vmatpush1.msra.mxu0 %v361
        %433 = vmatprep.subr.mxu0 %v360
        %434 = vmatpush1.msra.mxu0 %v359
        %435 = vmatprep.subr.mxu0 0.0
        %436 = vmatpush2.msra.mxu0 0.0
        %437 = vmatprep.subr.mxu0 0.0
        %438 = vmatpush2.msra.mxu0 0.0
        %439 = vmatprep.subr.mxu0 0.0
        %440 = vmatpush2.msra.mxu0 0.0
        %441 = vmatprep.subr.mxu0 0.0
        %442 = vmatpush2.msra.mxu0 0.0
        %443 = vmatprep.subr.mxu0 0.0
        %444 = vmatpush2.msra.mxu0 0.0
        %445 = vmatprep.subr.mxu0 0.0
        %446 = vmatpush2.msra.mxu0 0.0
        %447 = vmatprep.subr.mxu0 0.0
        %448 = vmatpush2.msra.mxu0 0.0
        %449 = vmatprep.subr.mxu0 0.0
        %450 = vmatpush2.msra.mxu0 0.0
        %451 = vmatprep.subr.mxu0 0.0
        %452 = vmatpush2.msra.mxu0 0.0
        %453 = vmatprep.subr.mxu0 0.0
        %454 = vmatpush2.msra.mxu0 0.0
        %455 = vmatprep.subr.mxu0 0.0
        %456 = vmatpush2.msra.mxu0 0.0
        %457 = vmatprep.subr.mxu0 0.0
        %458 = vmatpush2.msra.mxu0 0.0
        %459 = vmatprep.subr.mxu0 0.0
        %460 = vmatpush2.msra.mxu0 0.0
        %461 = vmatprep.subr.mxu0 0.0
        %462 = vmatpush2.msra.mxu0 0.0
        %463 = vmatprep.subr.mxu0 0.0
        %464 = vmatpush2.msra.mxu0 0.0
        %465 = vmatprep.subr.mxu0 0.0
        %466 = vmatpush2.msra.mxu0 0.0
        %467 = vmatprep.mubr.f32.mxu0 0.0
        %468 = vmatmul.mubr.f32.gmra.mxu0 %v343
        %v469 = vpop.f32.mrf.mxu0
        %v470 = vadd.f32 %v396, %v469
        %v471 = vpop.f32.mrf.mxu0
        %v472 = vadd.f32 %v400, %v471
        %473 = vmatprep.mubr.f32.mxu0 0.0
        %474 = vmatmul.mubr.f32.gmra.mxu0 %v344
        %v475 = vpop.f32.mrf.mxu0
        %v476 = vadd.f32 %v396, %v475
        %v477 = vpop.f32.mrf.mxu0
        %v478 = vadd.f32 %v400, %v477
        %479 = vmatprep.mubr.f32.mxu0 0.0
        %480 = vmatmul.mubr.f32.gmra.mxu0 %v345
        %v481 = vpop.f32.mrf.mxu0
        %v482 = vadd.f32 %v396, %v481
        %v483 = vpop.f32.mrf.mxu0
        %v484 = vadd.f32 %v400, %v483
        %485 = vmatprep.mubr.f32.mxu0 0.0
        %486 = vmatmul.mubr.f32.gmra.mxu0 %v346
        %v487 = vpop.f32.mrf.mxu0
        %v488 = vadd.f32 %v396, %v487
        %v489 = vpop.f32.mrf.mxu0
        %v490 = vadd.f32 %v400, %v489
        %491 = vmatprep.mubr.f32.mxu0 0.0
        %492 = vmatmul.mubr.f32.gmra.mxu0 %v347
        %v493 = vpop.f32.mrf.mxu0
        %v494 = vadd.f32 %v396, %v493
        %v495 = vpop.f32.mrf.mxu0
        %v496 = vadd.f32 %v400, %v495
        %497 = vmatprep.mubr.f32.mxu0 0.0
        %498 = vmatmul.mubr.f32.gmra.mxu0 %v348
        %v499 = vpop.f32.mrf.mxu0
        %v500 = vadd.f32 %v396, %v499
        %v501 = vpop.f32.mrf.mxu0
        %v502 = vadd.f32 %v400, %v501
        %503 = vmatprep.mubr.f32.mxu0 0.0
        %504 = vmatmul.mubr.f32.gmra.mxu0 %v349
        %v505 = vpop.f32.mrf.mxu0
        %v506 = vadd.f32 %v396, %v505
        %v507 = vpop.f32.mrf.mxu0
        %v508 = vadd.f32 %v400, %v507
        %509 = vmatprep.mubr.f32.mxu0 0.0
        %510 = vmatmul.mubr.f32.gmra.mxu0 %v350
        %v511 = vpop.f32.mrf.mxu0
        %v512 = vadd.f32 %v396, %v511
        %v513 = vpop.f32.mrf.mxu0
        %v514 = vadd.f32 %v400, %v513
        %515 = vmatprep.mubr.f32.mxu0 0.0
        %516 = vmatmul.mubr.f32.gmra.mxu0 %v351
        %v517 = vpop.f32.mrf.mxu0
        %v518 = vadd.f32 %v396, %v517
        %v519 = vpop.f32.mrf.mxu0
        %v520 = vadd.f32 %v400, %v519
        %521 = vmatprep.mubr.f32.mxu0 0.0
        %522 = vmatmul.mubr.f32.gmra.mxu0 %v352
        %v523 = vpop.f32.mrf.mxu0
        %v524 = vadd.f32 %v396, %v523
        %v525 = vpop.f32.mrf.mxu0
        %v526 = vadd.f32 %v400, %v525
        %527 = vmatprep.mubr.f32.mxu0 0.0
        %528 = vmatmul.mubr.f32.gmra.mxu0 %v353
        %v529 = vpop.f32.mrf.mxu0
        %v530 = vadd.f32 %v396, %v529
        %v531 = vpop.f32.mrf.mxu0
        %v532 = vadd.f32 %v400, %v531
        %533 = vmatprep.mubr.f32.mxu0 0.0
        %534 = vmatmul.mubr.f32.gmra.mxu0 %v354
        %v535 = vpop.f32.mrf.mxu0
        %v536 = vadd.f32 %v396, %v535
        %v537 = vpop.f32.mrf.mxu0
        %v538 = vadd.f32 %v400, %v537
        %539 = vmatprep.mubr.f32.mxu0 0.0
        %540 = vmatmul.mubr.f32.gmra.mxu0 %v355
        %v541 = vpop.f32.mrf.mxu0
        %v542 = vadd.f32 %v396, %v541
        %v543 = vpop.f32.mrf.mxu0
        %v544 = vadd.f32 %v400, %v543
        %545 = vmatprep.mubr.f32.mxu0 0.0
        %546 = vmatmul.mubr.f32.gmra.mxu0 %v356
        %v547 = vpop.f32.mrf.mxu0
        %v548 = vadd.f32 %v396, %v547
        %v549 = vpop.f32.mrf.mxu0
        %v550 = vadd.f32 %v400, %v549
        %551 = vmatprep.mubr.f32.mxu0 0.0
        %552 = vmatmul.mubr.f32.gmra.mxu0 %v357
        %v553 = vpop.f32.mrf.mxu0
        %v554 = vadd.f32 %v396, %v553
        %v555 = vpop.f32.mrf.mxu0
        %v556 = vadd.f32 %v400, %v555
        %557 = vmatprep.mubr.f32.mxu0 0.0
        %558 = vmatmul.mubr.f32.gmra.mxu0 %v358
        %v559 = vpop.f32.mrf.mxu0
        %v560 = vadd.f32 %v396, %v559
        %v561 = vpop.f32.mrf.mxu0
        %v562 = vadd.f32 %v400, %v561
        %563 = vdwg.mxu0
        %v564 = vmax.f32 %v470, 0.0
        %v565 = vmax.f32 %v472, 0.0
        %v566 = vmax.f32 %v476, 0.0
        %v567 = vmax.f32 %v478, 0.0
        %v568 = vmax.f32 %v482, 0.0
        %v569 = vmax.f32 %v484, 0.0
        %v570 = vmax.f32 %v488, 0.0
        %v571 = vmax.f32 %v490, 0.0
        %v572 = vmax.f32 %v494, 0.0
        %v573 = vmax.f32 %v496, 0.0
        %v574 = vmax.f32 %v500, 0.0
        %v575 = vmax.f32 %v502, 0.0
        %v576 = vmax.f32 %v506, 0.0
        %v577 = vmax.f32 %v508, 0.0
        %v578 = vmax.f32 %v512, 0.0
        %v579 = vmax.f32 %v514, 0.0
        %v580 = vmax.f32 %v518, 0.0
        %v581 = vmax.f32 %v520, 0.0
        %v582 = vmax.f32 %v524, 0.0
        %v583 = vmax.f32 %v526, 0.0
        %v584 = vmax.f32 %v530, 0.0
        %v585 = vmax.f32 %v532, 0.0
        %v586 = vmax.f32 %v536, 0.0
        %v587 = vmax.f32 %v538, 0.0
        %v588 = vmax.f32 %v542, 0.0
        %v589 = vmax.f32 %v544, 0.0
        %v590 = vmax.f32 %v548, 0.0
        %v591 = vmax.f32 %v550, 0.0
        %v592 = vmax.f32 %v554, 0.0
        %v593 = vmax.f32 %v556, 0.0
        %v594 = vmax.f32 %v560, 0.0
        %v595 = vmax.f32 %v562, 0.0
        %v596 = vld [vmem:[#allocation7] sm:$0xff]
        %v597 = vld [vmem:[#allocation7 + $0x8] sm:$0xff]
        %v598 = vld [vmem:[#allocation7 + $0x10] sm:$0xff]
        %v599 = vld [vmem:[#allocation7 + $0x18] sm:$0xff]
        %v600 = vld [vmem:[#allocation7 + $0x20] sm:$0xff]
        %v601 = vld [vmem:[#allocation7 + $0x28] sm:$0xff]
        %v602 = vld [vmem:[#allocation7 + $0x30] sm:$0xff]
        %v603 = vld [vmem:[#allocation7 + $0x38] sm:$0xff]
        %v604 = vld [vmem:[#allocation7 + $0x40] sm:$0xff]
        %v605 = vld [vmem:[#allocation7 + $0x48] sm:$0xff]
        %v606 = vld [vmem:[#allocation7 + $0x50] sm:$0xff]
        %v607 = vld [vmem:[#allocation7 + $0x58] sm:$0xff]
        %v608 = vld [vmem:[#allocation7 + $0x60] sm:$0xff]
        %v609 = vld [vmem:[#allocation7 + $0x68] sm:$0xff]
        %v610 = vld [vmem:[#allocation7 + $0x70] sm:$0xff]
        %v611 = vld [vmem:[#allocation7 + $0x78] sm:$0xff]
        %v612 = vld [vmem:[#allocation7 + $0x80] sm:$0xff]
        %v613 = vld [vmem:[#allocation7 + $0x88] sm:$0xff]
        %v614 = vld [vmem:[#allocation7 + $0x90] sm:$0xff]
        %v615 = vld [vmem:[#allocation7 + $0x98] sm:$0xff]
        %v616 = vld [vmem:[#allocation7 + $0xa0] sm:$0xff]
        %v617 = vld [vmem:[#allocation7 + $0xa8] sm:$0xff]
        %v618 = vld [vmem:[#allocation7 + $0xb0] sm:$0xff]
        %v619 = vld [vmem:[#allocation7 + $0xb8] sm:$0xff]
        %v620 = vld [vmem:[#allocation7 + $0xc0] sm:$0xff]
        %v621 = vld [vmem:[#allocation7 + $0xc8] sm:$0xff]
        %v622 = vld [vmem:[#allocation7 + $0xd0] sm:$0xff]
        %v623 = vld [vmem:[#allocation7 + $0xd8] sm:$0xff]
        %v624 = vld [vmem:[#allocation7 + $0xe0] sm:$0xff]
        %v625 = vld [vmem:[#allocation7 + $0xe8] sm:$0xff]
        %v626 = vld [vmem:[#allocation7 + $0xf0] sm:$0xff]
        %v627 = vld [vmem:[#allocation7 + $0xf8] sm:$0xff]
        %v628 = vld [vmem:[#allocation7 + $0x100] sm:$0xff]
        %v629 = vld [vmem:[#allocation7 + $0x108] sm:$0xff]
        %v630 = vld [vmem:[#allocation7 + $0x110] sm:$0xff]
        %v631 = vld [vmem:[#allocation7 + $0x118] sm:$0xff]
        %v632 = vld [vmem:[#allocation7 + $0x120] sm:$0xff]
        %v633 = vld [vmem:[#allocation7 + $0x128] sm:$0xff]
        %v634 = vld [vmem:[#allocation7 + $0x130] sm:$0xff]
        %v635 = vld [vmem:[#allocation7 + $0x138] sm:$0xff]
        %v636 = vld [vmem:[#allocation7 + $0x140] sm:$0xff]
        %v637 = vld [vmem:[#allocation7 + $0x148] sm:$0xff]
        %v638 = vld [vmem:[#allocation7 + $0x150] sm:$0xff]
        %v639 = vld [vmem:[#allocation7 + $0x158] sm:$0xff]
        %v640 = vld [vmem:[#allocation7 + $0x160] sm:$0xff]
        %v641 = vld [vmem:[#allocation7 + $0x168] sm:$0xff]
        %v642 = vld [vmem:[#allocation7 + $0x170] sm:$0xff]
        %v643 = vld [vmem:[#allocation7 + $0x178] sm:$0xff]
        %v644 = vld [vmem:[#allocation7 + $0x180] sm:$0xff]
        %v645 = vld [vmem:[#allocation7 + $0x188] sm:$0xff]
        %v646 = vld [vmem:[#allocation7 + $0x190] sm:$0xff]
        %v647 = vld [vmem:[#allocation7 + $0x198] sm:$0xff]
        %v648 = vld [vmem:[#allocation7 + $0x1a0] sm:$0xff]
        %v649 = vld [vmem:[#allocation7 + $0x1a8] sm:$0xff]
        %v650 = vld [vmem:[#allocation7 + $0x1b0] sm:$0xff]
        %v651 = vld [vmem:[#allocation7 + $0x1b8] sm:$0xff]
        %v652 = vld [vmem:[#allocation7 + $0x1c0] sm:$0xff]
        %v653 = vld [vmem:[#allocation7 + $0x1c8] sm:$0xff]
        %v654 = vld [vmem:[#allocation7 + $0x1d0] sm:$0xff]
        %v655 = vld [vmem:[#allocation7 + $0x1d8] sm:$0xff]
        %v656 = vld [vmem:[#allocation7 + $0x1e0] sm:$0xff]
        %v657 = vld [vmem:[#allocation7 + $0x1e8] sm:$0xff]
        %v658 = vld [vmem:[#allocation7 + $0x1f0] sm:$0xff]
        %v659 = vld [vmem:[#allocation7 + $0x1f8] sm:$0xff]
        %v660 = vld [vmem:[%s4] sm:$0x3]
        %v662 = vlaneseq
        %v663 = vshrl.u32 %v662, 7
        %v664 = vsub.s32 0, %v663
        %v665 = vrot.slane %v660, %v664
        %v666 = vlaneseq
        %v667 = vshrl.u32 %v666, 7
        %v668 = vsub.s32 1, %v667
        %v669 = vrot.slane %v660, %v668
        %672 = vmatprep.subr.mxu0 %v627
        %673 = vmatpush1.msra.mxu0 %v626
        %674 = vmatprep.subr.mxu0 %v625
        %675 = vmatpush1.msra.mxu0 %v624
        %676 = vmatprep.subr.mxu0 %v623
        %677 = vmatpush1.msra.mxu0 %v622
        %678 = vmatprep.subr.mxu0 %v621
        %679 = vmatpush1.msra.mxu0 %v620
        %680 = vmatprep.subr.mxu0 %v619
        %681 = vmatpush1.msra.mxu0 %v618
        %682 = vmatprep.subr.mxu0 %v617
        %683 = vmatpush1.msra.mxu0 %v616
        %684 = vmatprep.subr.mxu0 %v615
        %685 = vmatpush1.msra.mxu0 %v614
        %686 = vmatprep.subr.mxu0 %v613
        %687 = vmatpush1.msra.mxu0 %v612
        %688 = vmatprep.subr.mxu0 %v611
        %689 = vmatpush1.msra.mxu0 %v610
        %690 = vmatprep.subr.mxu0 %v609
        %691 = vmatpush1.msra.mxu0 %v608
        %692 = vmatprep.subr.mxu0 %v607
        %693 = vmatpush1.msra.mxu0 %v606
        %694 = vmatprep.subr.mxu0 %v605
        %695 = vmatpush1.msra.mxu0 %v604
        %696 = vmatprep.subr.mxu0 %v603
        %697 = vmatpush1.msra.mxu0 %v602
        %698 = vmatprep.subr.mxu0 %v601
        %699 = vmatpush1.msra.mxu0 %v600
        %700 = vmatprep.subr.mxu0 %v599
        %701 = vmatpush1.msra.mxu0 %v598
        %702 = vmatprep.subr.mxu0 %v597
        %703 = vmatpush1.msra.mxu0 %v596
        %704 = vmatprep.subr.mxu0 %v659
        %705 = vmatpush2.msra.mxu0 %v658
        %706 = vmatprep.subr.mxu0 %v657
        %707 = vmatpush2.msra.mxu0 %v656
        %708 = vmatprep.subr.mxu0 %v655
        %709 = vmatpush2.msra.mxu0 %v654
        %710 = vmatprep.subr.mxu0 %v653
        %711 = vmatpush2.msra.mxu0 %v652
        %712 = vmatprep.subr.mxu0 %v651
        %713 = vmatpush2.msra.mxu0 %v650
        %714 = vmatprep.subr.mxu0 %v649
        %715 = vmatpush2.msra.mxu0 %v648
        %716 = vmatprep.subr.mxu0 %v647
        %717 = vmatpush2.msra.mxu0 %v646
        %718 = vmatprep.subr.mxu0 %v645
        %719 = vmatpush2.msra.mxu0 %v644
        %720 = vmatprep.subr.mxu0 %v643
        %721 = vmatpush2.msra.mxu0 %v642
        %722 = vmatprep.subr.mxu0 %v641
        %723 = vmatpush2.msra.mxu0 %v640
        %724 = vmatprep.subr.mxu0 %v639
        %725 = vmatpush2.msra.mxu0 %v638
        %726 = vmatprep.subr.mxu0 %v637
        %727 = vmatpush2.msra.mxu0 %v636
        %728 = vmatprep.subr.mxu0 %v635
        %729 = vmatpush2.msra.mxu0 %v634
        %730 = vmatprep.subr.mxu0 %v633
        %731 = vmatpush2.msra.mxu0 %v632
        %732 = vmatprep.subr.mxu0 %v631
        %733 = vmatpush2.msra.mxu0 %v630
        %734 = vmatprep.subr.mxu0 %v629
        %735 = vmatpush2.msra.mxu0 %v628
        %736 = vmatprep.mubr.f32.mxu0 %v565
        %737 = vmatmul.mubr.f32.gmra.mxu0 %v564
        %v738 = vpop.f32.mrf.mxu0
        %v739 = vadd.f32 %v665, %v738
        %v740 = vpop.f32.mrf.mxu0
        %v741 = vadd.f32 %v669, %v740
        %742 = vmatprep.mubr.f32.mxu0 %v567
        %743 = vmatmul.mubr.f32.gmra.mxu0 %v566
        %v744 = vpop.f32.mrf.mxu0
        %v745 = vadd.f32 %v665, %v744
        %v746 = vpop.f32.mrf.mxu0
        %v747 = vadd.f32 %v669, %v746
        %748 = vmatprep.mubr.f32.mxu0 %v569
        %749 = vmatmul.mubr.f32.gmra.mxu0 %v568
        %v750 = vpop.f32.mrf.mxu0
        %v751 = vadd.f32 %v665, %v750
        %v752 = vpop.f32.mrf.mxu0
        %v753 = vadd.f32 %v669, %v752
        %754 = vmatprep.mubr.f32.mxu0 %v571
        %755 = vmatmul.mubr.f32.gmra.mxu0 %v570
        %v756 = vpop.f32.mrf.mxu0
        %v757 = vadd.f32 %v665, %v756
        %v758 = vpop.f32.mrf.mxu0
        %v759 = vadd.f32 %v669, %v758
        %760 = vmatprep.mubr.f32.mxu0 %v573
        %761 = vmatmul.mubr.f32.gmra.mxu0 %v572
        %v762 = vpop.f32.mrf.mxu0
        %v763 = vadd.f32 %v665, %v762
        %v764 = vpop.f32.mrf.mxu0
        %v765 = vadd.f32 %v669, %v764
        %766 = vmatprep.mubr.f32.mxu0 %v575
        %767 = vmatmul.mubr.f32.gmra.mxu0 %v574
        %v768 = vpop.f32.mrf.mxu0
        %v769 = vadd.f32 %v665, %v768
        %v770 = vpop.f32.mrf.mxu0
        %v771 = vadd.f32 %v669, %v770
        %772 = vmatprep.mubr.f32.mxu0 %v577
        %773 = vmatmul.mubr.f32.gmra.mxu0 %v576
        %v774 = vpop.f32.mrf.mxu0
        %v775 = vadd.f32 %v665, %v774
        %v776 = vpop.f32.mrf.mxu0
        %v777 = vadd.f32 %v669, %v776
        %778 = vmatprep.mubr.f32.mxu0 %v579
        %779 = vmatmul.mubr.f32.gmra.mxu0 %v578
        %v780 = vpop.f32.mrf.mxu0
        %v781 = vadd.f32 %v665, %v780
        %v782 = vpop.f32.mrf.mxu0
        %v783 = vadd.f32 %v669, %v782
        %784 = vmatprep.mubr.f32.mxu0 %v581
        %785 = vmatmul.mubr.f32.gmra.mxu0 %v580
        %v786 = vpop.f32.mrf.mxu0
        %v787 = vadd.f32 %v665, %v786
        %v788 = vpop.f32.mrf.mxu0
        %v789 = vadd.f32 %v669, %v788
        %790 = vmatprep.mubr.f32.mxu0 %v583
        %791 = vmatmul.mubr.f32.gmra.mxu0 %v582
        %v792 = vpop.f32.mrf.mxu0
        %v793 = vadd.f32 %v665, %v792
        %v794 = vpop.f32.mrf.mxu0
        %v795 = vadd.f32 %v669, %v794
        %796 = vmatprep.mubr.f32.mxu0 %v585
        %797 = vmatmul.mubr.f32.gmra.mxu0 %v584
        %v798 = vpop.f32.mrf.mxu0
        %v799 = vadd.f32 %v665, %v798
        %v800 = vpop.f32.mrf.mxu0
        %v801 = vadd.f32 %v669, %v800
        %802 = vmatprep.mubr.f32.mxu0 %v587
        %803 = vmatmul.mubr.f32.gmra.mxu0 %v586
        %v804 = vpop.f32.mrf.mxu0
        %v805 = vadd.f32 %v665, %v804
        %v806 = vpop.f32.mrf.mxu0
        %v807 = vadd.f32 %v669, %v806
        %808 = vmatprep.mubr.f32.mxu0 %v589
        %809 = vmatmul.mubr.f32.gmra.mxu0 %v588
        %v810 = vpop.f32.mrf.mxu0
        %v811 = vadd.f32 %v665, %v810
        %v812 = vpop.f32.mrf.mxu0
        %v813 = vadd.f32 %v669, %v812
        %814 = vmatprep.mubr.f32.mxu0 %v591
        %815 = vmatmul.mubr.f32.gmra.mxu0 %v590
        %v816 = vpop.f32.mrf.mxu0
        %v817 = vadd.f32 %v665, %v816
        %v818 = vpop.f32.mrf.mxu0
        %v819 = vadd.f32 %v669, %v818
        %820 = vmatprep.mubr.f32.mxu0 %v593
        %821 = vmatmul.mubr.f32.gmra.mxu0 %v592
        %v822 = vpop.f32.mrf.mxu0
        %v823 = vadd.f32 %v665, %v822
        %v824 = vpop.f32.mrf.mxu0
        %v825 = vadd.f32 %v669, %v824
        %826 = vmatprep.mubr.f32.mxu0 %v595
        %827 = vmatmul.mubr.f32.gmra.mxu0 %v594
        %v828 = vpop.f32.mrf.mxu0
        %v829 = vadd.f32 %v665, %v828
        %v830 = vpop.f32.mrf.mxu0
        %v831 = vadd.f32 %v669, %v830
        %832 = vdwg.mxu0
        %v833 = vmax.f32 %v739, 0.0
        %v834 = vmax.f32 %v741, 0.0
        %v835 = vmax.f32 %v745, 0.0
        %v836 = vmax.f32 %v747, 0.0
        %v837 = vmax.f32 %v751, 0.0
        %v838 = vmax.f32 %v753, 0.0
        %v839 = vmax.f32 %v757, 0.0
        %v840 = vmax.f32 %v759, 0.0
        %v841 = vmax.f32 %v763, 0.0
        %v842 = vmax.f32 %v765, 0.0
        %v843 = vmax.f32 %v769, 0.0
        %v844 = vmax.f32 %v771, 0.0
        %v845 = vmax.f32 %v775, 0.0
        %v846 = vmax.f32 %v777, 0.0
        %v847 = vmax.f32 %v781, 0.0
        %v848 = vmax.f32 %v783, 0.0
        %v849 = vmax.f32 %v787, 0.0
        %v850 = vmax.f32 %v789, 0.0
        %v851 = vmax.f32 %v793, 0.0
        %v852 = vmax.f32 %v795, 0.0
        %v853 = vmax.f32 %v799, 0.0
        %v854 = vmax.f32 %v801, 0.0
        %v855 = vmax.f32 %v805, 0.0
        %v856 = vmax.f32 %v807, 0.0
        %v857 = vmax.f32 %v811, 0.0
        %v858 = vmax.f32 %v813, 0.0
        %v859 = vmax.f32 %v817, 0.0
        %v860 = vmax.f32 %v819, 0.0
        %v861 = vmax.f32 %v823, 0.0
        %v862 = vmax.f32 %v825, 0.0
        %v863 = vmax.f32 %v829, 0.0
        %v864 = vmax.f32 %v831, 0.0
        %v865 = vld [vmem:[#allocation8] sm:$0xff]
        %v866 = vld [vmem:[#allocation8 + $0x8] sm:$0xff]
        %v867 = vld [vmem:[#allocation8 + $0x10] sm:$0xff]
        %v868 = vld [vmem:[#allocation8 + $0x18] sm:$0xff]
        %v869 = vld [vmem:[#allocation8 + $0x20] sm:$0xff]
        %v870 = vld [vmem:[#allocation8 + $0x28] sm:$0xff]
        %v871 = vld [vmem:[#allocation8 + $0x30] sm:$0xff]
        %v872 = vld [vmem:[#allocation8 + $0x38] sm:$0xff]
        %v873 = vld [vmem:[#allocation8 + $0x40] sm:$0xff]
        %v874 = vld [vmem:[#allocation8 + $0x48] sm:$0xff]
        %v875 = vld [vmem:[#allocation8 + $0x50] sm:$0xff]
        %v876 = vld [vmem:[#allocation8 + $0x58] sm:$0xff]
        %v877 = vld [vmem:[#allocation8 + $0x60] sm:$0xff]
        %v878 = vld [vmem:[#allocation8 + $0x68] sm:$0xff]
        %v879 = vld [vmem:[#allocation8 + $0x70] sm:$0xff]
        %v880 = vld [vmem:[#allocation8 + $0x78] sm:$0xff]
        %v881 = vld [vmem:[#allocation8 + $0x80] sm:$0xff]
        %v882 = vld [vmem:[#allocation8 + $0x88] sm:$0xff]
        %v883 = vld [vmem:[#allocation8 + $0x90] sm:$0xff]
        %v884 = vld [vmem:[#allocation8 + $0x98] sm:$0xff]
        %v885 = vld [vmem:[#allocation8 + $0xa0] sm:$0xff]
        %v886 = vld [vmem:[#allocation8 + $0xa8] sm:$0xff]
        %v887 = vld [vmem:[#allocation8 + $0xb0] sm:$0xff]
        %v888 = vld [vmem:[#allocation8 + $0xb8] sm:$0xff]
        %v889 = vld [vmem:[#allocation8 + $0xc0] sm:$0xff]
        %v890 = vld [vmem:[#allocation8 + $0xc8] sm:$0xff]
        %v891 = vld [vmem:[#allocation8 + $0xd0] sm:$0xff]
        %v892 = vld [vmem:[#allocation8 + $0xd8] sm:$0xff]
        %v893 = vld [vmem:[#allocation8 + $0xe0] sm:$0xff]
        %v894 = vld [vmem:[#allocation8 + $0xe8] sm:$0xff]
        %v895 = vld [vmem:[#allocation8 + $0xf0] sm:$0xff]
        %v896 = vld [vmem:[#allocation8 + $0xf8] sm:$0xff]
        %v897 = vld [vmem:[%s6] sm:$0x1]
        %v899 = vlaneseq
        %v900 = vshrl.u32 %v899, 7
        %v901 = vsub.s32 0, %v900
        %v902 = vrot.slane %v897, %v901
        %904 = vmatprep.subr.mxu0 0.0
        %905 = vmatpush1.msra.mxu0 %v880
        %906 = vmatprep.subr.mxu0 0.0
        %907 = vmatpush1.msra.mxu0 %v879
        %908 = vmatprep.subr.mxu0 0.0
        %909 = vmatpush1.msra.mxu0 %v878
        %910 = vmatprep.subr.mxu0 0.0
        %911 = vmatpush1.msra.mxu0 %v877
        %912 = vmatprep.subr.mxu0 0.0
        %913 = vmatpush1.msra.mxu0 %v876
        %914 = vmatprep.subr.mxu0 0.0
        %915 = vmatpush1.msra.mxu0 %v875
        %916 = vmatprep.subr.mxu0 0.0
        %917 = vmatpush1.msra.mxu0 %v874
        %918 = vmatprep.subr.mxu0 0.0
        %919 = vmatpush1.msra.mxu0 %v873
        %920 = vmatprep.subr.mxu0 0.0
        %921 = vmatpush1.msra.mxu0 %v872
        %922 = vmatprep.subr.mxu0 0.0
        %923 = vmatpush1.msra.mxu0 %v871
        %924 = vmatprep.subr.mxu0 0.0
        %925 = vmatpush1.msra.mxu0 %v870
        %926 = vmatprep.subr.mxu0 0.0
        %927 = vmatpush1.msra.mxu0 %v869
        %928 = vmatprep.subr.mxu0 0.0
        %929 = vmatpush1.msra.mxu0 %v868
        %930 = vmatprep.subr.mxu0 0.0
        %931 = vmatpush1.msra.mxu0 %v867
        %932 = vmatprep.subr.mxu0 0.0
        %933 = vmatpush1.msra.mxu0 %v866
        %934 = vmatprep.subr.mxu0 0.0
        %935 = vmatpush1.msra.mxu0 %v865
        %936 = vmatprep.subr.mxu0 0.0
        %937 = vmatpush2.msra.mxu0 %v896
        %938 = vmatprep.subr.mxu0 0.0
        %939 = vmatpush2.msra.mxu0 %v895
        %940 = vmatprep.subr.mxu0 0.0
        %941 = vmatpush2.msra.mxu0 %v894
        %942 = vmatprep.subr.mxu0 0.0
        %943 = vmatpush2.msra.mxu0 %v893
        %944 = vmatprep.subr.mxu0 0.0
        %945 = vmatpush2.msra.mxu0 %v892
        %946 = vmatprep.subr.mxu0 0.0
        %947 = vmatpush2.msra.mxu0 %v891
        %948 = vmatprep.subr.mxu0 0.0
        %949 = vmatpush2.msra.mxu0 %v890
        %950 = vmatprep.subr.mxu0 0.0
        %951 = vmatpush2.msra.mxu0 %v889
        %952 = vmatprep.subr.mxu0 0.0
        %953 = vmatpush2.msra.mxu0 %v888
        %954 = vmatprep.subr.mxu0 0.0
        %955 = vmatpush2.msra.mxu0 %v887
        %956 = vmatprep.subr.mxu0 0.0
        %957 = vmatpush2.msra.mxu0 %v886
        %958 = vmatprep.subr.mxu0 0.0
        %959 = vmatpush2.msra.mxu0 %v885
        %960 = vmatprep.subr.mxu0 0.0
        %961 = vmatpush2.msra.mxu0 %v884
        %962 = vmatprep.subr.mxu0 0.0
        %963 = vmatpush2.msra.mxu0 %v883
        %964 = vmatprep.subr.mxu0 0.0
        %965 = vmatpush2.msra.mxu0 %v882
        %966 = vmatprep.subr.mxu0 0.0
        %967 = vmatpush2.msra.mxu0 %v881
        %968 = vmatprep.mubr.f32.mxu0 %v834
        %969 = vmatmul.mubr.f32.gmra.mxu0 %v833
        %v970 = vpop.f32.mrf.mxu0
        %v971 = vadd.f32 %v902, %v970
        %v972 = vpop.f32.mrf.mxu0
        %973 = vmatprep.mubr.f32.mxu0 %v836
        %974 = vmatmul.mubr.f32.gmra.mxu0 %v835
        %v975 = vpop.f32.mrf.mxu0
        %v976 = vadd.f32 %v902, %v975
        %v977 = vpop.f32.mrf.mxu0
        %978 = vmatprep.mubr.f32.mxu0 %v838
        %979 = vmatmul.mubr.f32.gmra.mxu0 %v837
        %v980 = vpop.f32.mrf.mxu0
        %v981 = vadd.f32 %v902, %v980
        %v982 = vpop.f32.mrf.mxu0
        %983 = vmatprep.mubr.f32.mxu0 %v840
        %984 = vmatmul.mubr.f32.gmra.mxu0 %v839
        %v985 = vpop.f32.mrf.mxu0
        %v986 = vadd.f32 %v902, %v985
        %v987 = vpop.f32.mrf.mxu0
        %988 = vmatprep.mubr.f32.mxu0 %v842
        %989 = vmatmul.mubr.f32.gmra.mxu0 %v841
        %v990 = vpop.f32.mrf.mxu0
        %v991 = vadd.f32 %v902, %v990
        %v992 = vpop.f32.mrf.mxu0
        %993 = vmatprep.mubr.f32.mxu0 %v844
        %994 = vmatmul.mubr.f32.gmra.mxu0 %v843
        %v995 = vpop.f32.mrf.mxu0
        %v996 = vadd.f32 %v902, %v995
        %v997 = vpop.f32.mrf.mxu0
        %998 = vmatprep.mubr.f32.mxu0 %v846
        %999 = vmatmul.mubr.f32.gmra.mxu0 %v845
        %v1000 = vpop.f32.mrf.mxu0
        %v1001 = vadd.f32 %v902, %v1000
        %v1002 = vpop.f32.mrf.mxu0
        %1003 = vmatprep.mubr.f32.mxu0 %v848
        %1004 = vmatmul.mubr.f32.gmra.mxu0 %v847
        %v1005 = vpop.f32.mrf.mxu0
        %v1006 = vadd.f32 %v902, %v1005
        %v1007 = vpop.f32.mrf.mxu0
        %1008 = vmatprep.mubr.f32.mxu0 %v850
        %1009 = vmatmul.mubr.f32.gmra.mxu0 %v849
        %v1010 = vpop.f32.mrf.mxu0
        %v1011 = vadd.f32 %v902, %v1010
        %v1012 = vpop.f32.mrf.mxu0
        %1013 = vmatprep.mubr.f32.mxu0 %v852
        %1014 = vmatmul.mubr.f32.gmra.mxu0 %v851
        %v1015 = vpop.f32.mrf.mxu0
        %v1016 = vadd.f32 %v902, %v1015
        %v1017 = vpop.f32.mrf.mxu0
        %1018 = vmatprep.mubr.f32.mxu0 %v854
        %1019 = vmatmul.mubr.f32.gmra.mxu0 %v853
        %v1020 = vpop.f32.mrf.mxu0
        %v1021 = vadd.f32 %v902, %v1020
        %v1022 = vpop.f32.mrf.mxu0
        %1023 = vmatprep.mubr.f32.mxu0 %v856
        %1024 = vmatmul.mubr.f32.gmra.mxu0 %v855
        %v1025 = vpop.f32.mrf.mxu0
        %v1026 = vadd.f32 %v902, %v1025
        %v1027 = vpop.f32.mrf.mxu0
        %1028 = vmatprep.mubr.f32.mxu0 %v858
        %1029 = vmatmul.mubr.f32.gmra.mxu0 %v857
        %v1030 = vpop.f32.mrf.mxu0
        %v1031 = vadd.f32 %v902, %v1030
        %v1032 = vpop.f32.mrf.mxu0
        %1033 = vmatprep.mubr.f32.mxu0 %v860
        %1034 = vmatmul.mubr.f32.gmra.mxu0 %v859
        %v1035 = vpop.f32.mrf.mxu0
        %v1036 = vadd.f32 %v902, %v1035
        %v1037 = vpop.f32.mrf.mxu0
        %1038 = vmatprep.mubr.f32.mxu0 %v862
        %1039 = vmatmul.mubr.f32.gmra.mxu0 %v861
        %v1040 = vpop.f32.mrf.mxu0
        %v1041 = vadd.f32 %v902, %v1040
        %v1042 = vpop.f32.mrf.mxu0
        %1043 = vmatprep.mubr.f32.mxu0 %v864
        %1044 = vmatmul.mubr.f32.gmra.mxu0 %v863
        %v1045 = vpop.f32.mrf.mxu0
        %v1046 = vadd.f32 %v902, %v1045
        %v1047 = vpop.f32.mrf.mxu0
        %1048 = vdwg.mxu0
        %1049 = vmax.xlane.f32.xlu0 %v971
        %v1050 = vpop.xlane.xlu0 %1049
        %1051 = vmax.xlane.f32.xlu0 %v976
        %v1052 = vpop.xlane.xlu0 %1051
        %1053 = vmax.xlane.f32.xlu0 %v981
        %v1054 = vpop.xlane.xlu0 %1053
        %1055 = vmax.xlane.f32.xlu0 %v986
        %v1056 = vpop.xlane.xlu0 %1055
        %1057 = vmax.xlane.f32.xlu0 %v991
        %v1058 = vpop.xlane.xlu0 %1057
        %1059 = vmax.xlane.f32.xlu0 %v996
        %v1060 = vpop.xlane.xlu0 %1059
        %1061 = vmax.xlane.f32.xlu0 %v1001
        %v1062 = vpop.xlane.xlu0 %1061
        %1063 = vmax.xlane.f32.xlu0 %v1006
        %v1064 = vpop.xlane.xlu0 %1063
        %1065 = vmax.xlane.f32.xlu0 %v1011
        %v1066 = vpop.xlane.xlu0 %1065
        %1067 = vmax.xlane.f32.xlu0 %v1016
        %v1068 = vpop.xlane.xlu0 %1067
        %1069 = vmax.xlane.f32.xlu0 %v1021
        %v1070 = vpop.xlane.xlu0 %1069
        %1071 = vmax.xlane.f32.xlu0 %v1026
        %v1072 = vpop.xlane.xlu0 %1071
        %1073 = vmax.xlane.f32.xlu0 %v1031
        %v1074 = vpop.xlane.xlu0 %1073
        %1075 = vmax.xlane.f32.xlu0 %v1036
        %v1076 = vpop.xlane.xlu0 %1075
        %1077 = vmax.xlane.f32.xlu0 %v1041
        %v1078 = vpop.xlane.xlu0 %1077
        %1079 = vmax.xlane.f32.xlu0 %v1046
        %v1080 = vpop.xlane.xlu0 %1079
        %v1081 = vsub.f32 %v971, %v1050
        %v1082 = vsub.f32 %v976, %v1052
        %v1083 = vsub.f32 %v981, %v1054
        %v1084 = vsub.f32 %v986, %v1056
        %v1085 = vsub.f32 %v991, %v1058
        %v1086 = vsub.f32 %v996, %v1060
        %v1087 = vsub.f32 %v1001, %v1062
        %v1088 = vsub.f32 %v1006, %v1064
        %v1089 = vsub.f32 %v1011, %v1066
        %v1090 = vsub.f32 %v1016, %v1068
        %v1091 = vsub.f32 %v1021, %v1070
        %v1092 = vsub.f32 %v1026, %v1072
        %v1093 = vsub.f32 %v1031, %v1074
        %v1094 = vsub.f32 %v1036, %v1076
        %v1095 = vsub.f32 %v1041, %v1078
        %v1096 = vsub.f32 %v1046, %v1080
        %v1097 = vmul.f32 %v1081, 1.442695
        %v1098 = vpow.pop %v1097
        %v1099 = vmul.f32 %v1082, 1.442695
        %v1100 = vpow.pop %v1099
        %v1101 = vmul.f32 %v1083, 1.442695
        %v1102 = vpow.pop %v1101
        %v1103 = vmul.f32 %v1084, 1.442695
        %v1104 = vpow.pop %v1103
        %v1105 = vmul.f32 %v1085, 1.442695
        %v1106 = vpow.pop %v1105
        %v1107 = vmul.f32 %v1086, 1.442695
        %v1108 = vpow.pop %v1107
        %v1109 = vmul.f32 %v1087, 1.442695
        %v1110 = vpow.pop %v1109
        %v1111 = vmul.f32 %v1088, 1.442695
        %v1112 = vpow.pop %v1111
        %v1113 = vmul.f32 %v1089, 1.442695
        %v1114 = vpow.pop %v1113
        %v1115 = vmul.f32 %v1090, 1.442695
        %v1116 = vpow.pop %v1115
        %v1117 = vmul.f32 %v1091, 1.442695
        %v1118 = vpow.pop %v1117
        %v1119 = vmul.f32 %v1092, 1.442695
        %v1120 = vpow.pop %v1119
        %v1121 = vmul.f32 %v1093, 1.442695
        %v1122 = vpow.pop %v1121
        %v1123 = vmul.f32 %v1094, 1.442695
        %v1124 = vpow.pop %v1123
        %v1125 = vmul.f32 %v1095, 1.442695
        %v1126 = vpow.pop %v1125
        %v1127 = vmul.f32 %v1096, 1.442695
        %v1128 = vpow.pop %v1127
        %1129 = vadd.xlane.f32.xlu0 %v1098
        %v1130 = vpop.xlane.xlu0 %1129
        %1131 = vadd.xlane.f32.xlu0 %v1100
        %v1132 = vpop.xlane.xlu0 %1131
        %1133 = vadd.xlane.f32.xlu0 %v1102
        %v1134 = vpop.xlane.xlu0 %1133
        %1135 = vadd.xlane.f32.xlu0 %v1104
        %v1136 = vpop.xlane.xlu0 %1135
        %1137 = vadd.xlane.f32.xlu0 %v1106
        %v1138 = vpop.xlane.xlu0 %1137
        %1139 = vadd.xlane.f32.xlu0 %v1108
        %v1140 = vpop.xlane.xlu0 %1139
        %1141 = vadd.xlane.f32.xlu0 %v1110
        %v1142 = vpop.xlane.xlu0 %1141
        %1143 = vadd.xlane.f32.xlu0 %v1112
        %v1144 = vpop.xlane.xlu0 %1143
        %1145 = vadd.xlane.f32.xlu0 %v1114
        %v1146 = vpop.xlane.xlu0 %1145
        %1147 = vadd.xlane.f32.xlu0 %v1116
        %v1148 = vpop.xlane.xlu0 %1147
        %1149 = vadd.xlane.f32.xlu0 %v1118
        %v1150 = vpop.xlane.xlu0 %1149
        %1151 = vadd.xlane.f32.xlu0 %v1120
        %v1152 = vpop.xlane.xlu0 %1151
        %1153 = vadd.xlane.f32.xlu0 %v1122
        %v1154 = vpop.xlane.xlu0 %1153
        %1155 = vadd.xlane.f32.xlu0 %v1124
        %v1156 = vpop.xlane.xlu0 %1155
        %1157 = vadd.xlane.f32.xlu0 %v1126
        %v1158 = vpop.xlane.xlu0 %1157
        %1159 = vadd.xlane.f32.xlu0 %v1128
        %v1160 = vpop.xlane.xlu0 %1159
        %v1161 = vrcp.pop %v1130
        %v1162 = vrcp.pop %v1132
        %v1163 = vrcp.pop %v1134
        %v1164 = vrcp.pop %v1136
        %v1165 = vrcp.pop %v1138
        %v1166 = vrcp.pop %v1140
        %v1167 = vrcp.pop %v1142
        %v1168 = vrcp.pop %v1144
        %v1169 = vrcp.pop %v1146
        %v1170 = vrcp.pop %v1148
        %v1171 = vrcp.pop %v1150
        %v1172 = vrcp.pop %v1152
        %v1173 = vrcp.pop %v1154
        %v1174 = vrcp.pop %v1156
        %v1175 = vrcp.pop %v1158
        %v1176 = vrcp.pop %v1160
        %v1177 = vmul.f32 %v1098, %v1161
        %v1178 = vmul.f32 %v1100, %v1162
        %v1179 = vmul.f32 %v1102, %v1163
        %v1180 = vmul.f32 %v1104, %v1164
        %v1181 = vmul.f32 %v1106, %v1165
        %v1182 = vmul.f32 %v1108, %v1166
        %v1183 = vmul.f32 %v1110, %v1167
        %v1184 = vmul.f32 %v1112, %v1168
        %v1185 = vmul.f32 %v1114, %v1169
        %v1186 = vmul.f32 %v1116, %v1170
        %v1187 = vmul.f32 %v1118, %v1171
        %v1188 = vmul.f32 %v1120, %v1172
        %v1189 = vmul.f32 %v1122, %v1173
        %v1190 = vmul.f32 %v1124, %v1174
        %v1191 = vmul.f32 %v1126, %v1175
        %v1192 = vmul.f32 %v1128, %v1176
        %1193 = vst [vmem:[%s340] sm:$0xff] %v1177
        %1194 = vst [vmem:[%s340 + $0x8] sm:$0xff] %v1178
        %1195 = vst [vmem:[%s340 + $0x10] sm:$0xff] %v1179
        %1196 = vst [vmem:[%s340 + $0x18] sm:$0xff] %v1180
        %1197 = vst [vmem:[%s340 + $0x20] sm:$0xff] %v1181
        %1198 = vst [vmem:[%s340 + $0x28] sm:$0xff] %v1182
        %1199 = vst [vmem:[%s340 + $0x30] sm:$0xff] %v1183
        %1200 = vst [vmem:[%s340 + $0x38] sm:$0xff] %v1184
        %1201 = vst [vmem:[%s340 + $0x40] sm:$0xff] %v1185
        %1202 = vst [vmem:[%s340 + $0x48] sm:$0xff] %v1186
        %1203 = vst [vmem:[%s340 + $0x50] sm:$0xff] %v1187
        %1204 = vst [vmem:[%s340 + $0x58] sm:$0xff] %v1188
        %1205 = vst [vmem:[%s340 + $0x60] sm:$0xff] %v1189
        %1206 = vst [vmem:[%s340 + $0x68] sm:$0xff] %v1190
        %1207 = vst [vmem:[%s340 + $0x70] sm:$0xff] %v1191
        %1208 = vst [vmem:[%s340 + $0x78] sm:$0xff] %v1192
        %s1209 = sand.u32 %s186, 1
        %s1210 = scalar_lea.sflag [#allocation4], %s1209
        %s1211 = sand.u32 %s186, 1
        %s1212 = smul.addr %s1211, 128
        %s1213 = scalar_lea.vmem [#allocation10], %s1212
        // Predicated region
        $region65: #{tpu_custom_call.1} parent=47 // pred_check
          %p1214 = pneg %p196
        $region66: #{tpu_custom_call.1} parent=47 // pred_check_branch
          %1216 = sbr.rel (%p1214) target = $region68
        $region67: #{tpu_custom_call.1} parent=47 // pred_region
          %s1217 = smul.u32 16, %s26
          %s1219 = ssub.s32 2048, 2048
          %1220 = vsyncadd %s1210, %s1219
          %s1221 = smul.addr %s1217, 128
          %s1222 = scalar_lea.hbm %s7, %s1221
          %s1223 = sshll.u32 %s1213, 4
          %s1224 = int_to_ptr.vmem [resolvable:$true] %s1223
          %1229 = dma.vmem_to_hbm [thread:$0]  %s1224, 2048, %s1222, %s1210, 128, 128, 8
        $region68: #{tpu_custom_call.1} parent=47 // pred_fallthru
          _
      $region48: #{tpu_custom_call.1} parent=5 // pred_fallthru
        _
      %p1230 = scmp.le.s32.totalorder 2, %s21
      // Predicated region
      $region69: #{tpu_custom_call.1} parent=5 // pred_check
        %p1231 = pneg %p1230
      $region70: #{tpu_custom_call.1} parent=5 // pred_check_branch
        %1233 = sbr.rel (%p1231) target = $region72
      $region71: #{tpu_custom_call.1} parent=5 // pred_region
        %s1234 = ssub.s32 %s21, 2
        // Predicated region
        $region73: #{tpu_custom_call.1} parent=71 // pred_check
          %p1235 = pneg %p202
        $region74: #{tpu_custom_call.1} parent=71 // pred_check_branch
          %1237 = sbr.rel (%p1235) target = $region76
        $region75: #{tpu_custom_call.1} parent=71 // pred_region
          %s1238 = sand.u32 %s187, 1
          %s1239 = scalar_lea.sflag [#allocation4], %s1238
          %s1240 = sand.u32 %s187, 1
          %s1241 = smul.addr %s1240, 128
          %s1242 = scalar_lea.vmem [#allocation10], %s1241
          %1243 = dma.done %s1239, 2048
        $region76: #{tpu_custom_call.1} parent=71 // pred_fallthru
          _
      $region72: #{tpu_custom_call.1} parent=5 // pred_fallthru
        _
    $region6: #{tpu_custom_call.1} parent=1 // loop_footer
      %s25 = sadd.s32 1, %s21
    $region7: #{tpu_custom_call.1} parent=1 // loop_footer_branch
      %20 = sbr.rel target = $region3
    $region8: #{tpu_custom_call.1} parent=1 // loop_exit
      _
    %1244 = vsyncpa [#allocation3], 1
    %s1245 = scalar_lea.sflag [#allocation3], 1
    %1246 = vsyncpa %s1245, 1
    %1247 = vsyncpa [#allocation6], 1
    %1248 = vsyncpa [#allocation9], 1
    %1249 = vsyncpa [#allocation4], 1
    %s1250 = scalar_lea.sflag [#allocation4], 1
    %1251 = vsyncpa %s1250, 1

// kernel: tpu_custom_call.1
$region0: #{tpu_custom_call.1}
  #allocation0 [shape = 'u32[]', space=smem, size = 0x4, offset = 0x4, fixed_abs, tag = 'smem constant byte address 0x4 - core index']
  #allocation1 [shape = 'u32[144,128]{1,0:T(1,128)}', space=vmem, size = 0x12000, scoped, tag = 'internal scratch']
  %s0 = inlined_call_operand.hbm [shape: f32[256,128], index: 0, kind: input, shape index: {}]
  %s1 = inlined_call_operand.hbm [shape: f32[128,256], index: 1, kind: input, shape index: {}]
  %s2 = inlined_call_operand.vmem [shape: f32[1,256], index: 2, kind: input, shape index: {}]
  %s3 = inlined_call_operand.hbm [shape: f32[256,256], index: 3, kind: input, shape index: {}]
  %s4 = inlined_call_operand.vmem [shape: f32[1,256], index: 4, kind: input, shape index: {}]
  %s5 = inlined_call_operand.hbm [shape: f32[256,128], index: 5, kind: input, shape index: {}]
  %s6 = inlined_call_operand.vmem [shape: f32[1,128], index: 6, kind: input, shape index: {}]
  %s7 = inlined_call_operand.hbm [shape: f32[256,128], index: 7, kind: output, shape index: {}]
  %s8 = sld [smem:[#allocation0]]
  $region77: #{tpu_custom_call.1} parent=0
    _
  %s10 = ssub.s32 1, %s8
  %s11 = scalar_select 0, %s10, %s8
  $region1: #{tpu_custom_call.1} parent=0
    #allocation2 [shape = 'u8[131072]{0}', space=vmem, size = 0x20000, scoped, tag = 'input window, operand 0']
    #allocation3 [shape = 's32[2]{0}', space=sflag, size = 0x8, scoped, tag = 'scoped memory for tpu_custom_call.1']
    #allocation4 [shape = 's32[2]{0}', space=sflag, size = 0x8, scoped, tag = 'scoped memory for tpu_custom_call.1']
    #allocation5 [shape = 'u8[131072]{0}', space=vmem, size = 0x20000, scoped, tag = 'input window, operand 1, single buffered']
    #allocation6 [shape = 's32[1]{0}', space=sflag, size = 0x4, scoped, tag = 'scoped memory for tpu_custom_call.1']
    #allocation7 [shape = 'u8[262144]{0}', space=vmem, size = 0x40000, scoped, tag = 'input window, operand 3, single buffered']
    #allocation8 [shape = 'u8[131072]{0}', space=vmem, size = 0x20000, scoped, tag = 'input window, operand 5, single buffered']
    #allocation9 [shape = 's32[1]{0}', space=sflag, size = 0x4, scoped, tag = 'scoped memory for tpu_custom_call.1']
    #allocation10 [shape = 'u8[131072]{0}', space=vmem, size = 0x20000, scoped, tag = 'output window, operand 0']
    %12 = vsyncpa [#allocation3], 0
    %s13 = scalar_lea.sflag [#allocation3], 1
    %14 = vsyncpa %s13, 0
    %15 = vsyncpa [#allocation6], 0
    %16 = vsyncpa [#allocation9], 0
    %17 = vsyncpa [#allocation4], 0
    %s18 = scalar_lea.sflag [#allocation4], 1
    %19 = vsyncpa %s18, 0
    loop: start=0, step=1, limit=4
    $region2: #{tpu_custom_call.1} parent=1 // loop_pre_header
      _
    $region3: #{tpu_custom_call.1} parent=1 // loop_header
      %s21 = sphi 0, %s25
      %p22 = scmp.ge.s32.totalorder %s21, 4
      %s31 = sphi 0, %s33
      %s34 = sphi 0, %s31
      %s35 = sphi 0, %s34
      %s51 = sphi 0, %s35
      %s55 = sphi 0, %s55
      %s57 = sphi 0, %s55
      %s58 = sphi 0, %s57
      %s72 = sphi 0, %s58
      %s76 = sphi 0, %s76
      %s78 = sphi 0, %s76
      %s79 = sphi 0, %s78
      %s93 = sphi 0, %s79
      %s97 = sphi 0, %s97
      %s99 = sphi 0, %s97
      %s100 = sphi 0, %s99
      %s114 = sphi 0, %s100
      %s118 = sphi 0, %s118
      %s120 = sphi 0, %s118
      %s121 = sphi 0, %s120
      %s135 = sphi 0, %s121
      %s139 = sphi 0, %s139
      %s141 = sphi 0, %s139
      %s142 = sphi 0, %s141
      %s156 = sphi 0, %s142
      %s160 = sphi 0, %s160
      %s162 = sphi 0, %s160
      %s163 = sphi 0, %s162
      %s177 = sphi 0, %s163
      %s183 = sphi 0, %s185
      %s186 = sphi 0, %s183
      %s187 = sphi 0, %s186
      %s203 = sphi 0, %s187
    $region4: #{tpu_custom_call.1} parent=1 // loop_header_branch
      %24 = sbr.rel (%p22) target = $region8
    $region5: #{tpu_custom_call.1} parent=1 // loop_body
      %s26 = ssub.s32 %s21, 1
      %s27 = ssub.s32 %s21, 2
      %s28 = sadd.s32 %s21, 1
      %s29 = ssub.s32 %s21, %s28
      %p30 = scmp.eq.s32.totalorder %s29, 0
      %s32 = sadd.s32 %s31, 1
      %s33 = scalar_select %p30, %s31, %s32
      %p36 = pneg %p30
      %p37 = scmp.eq.s32.totalorder %s21, 1
      %p38 = por %p36, %p37
      %p39 = scmp.ne.s32.totalorder %s31, %s34
      %p40 = scmp.eq.s32.totalorder %s21, 0
      %p41 = por %p39, %p40
      %p42 = scmp.ne.s32.totalorder %s31, %s34
      %p43 = scmp.eq.s32.totalorder %s26, 1
      %p44 = por %p42, %p43
      %p45 = scmp.ne.s32.totalorder %s34, %s35
      %p46 = scmp.eq.s32.totalorder %s26, 0
      %p47 = por %p45, %p46
      %p48 = scmp.ne.s32.totalorder %s34, %s35
      %p49 = scmp.eq.s32.totalorder %s27, 1
      %p50 = por %p48, %p49
      %p52 = scmp.ne.s32.totalorder %s35, %s51
      %p53 = scmp.eq.s32.totalorder %s27, 0
      %p54 = por %p52, %p53
      %s56 = sadd.s32 %s55, 1
      %p59 = scmp.eq.s32.totalorder %s21, 1
      %p60 = scmp.ne.s32.totalorder %s55, %s57
      %p61 = scmp.eq.s32.totalorder %s21, 0
      %p62 = por %p60, %p61
      %p63 = scmp.ne.s32.totalorder %s55, %s57
      %p64 = scmp.eq.s32.totalorder %s26, 1
      %p65 = por %p63, %p64
      %p66 = scmp.ne.s32.totalorder %s57, %s58
      %p67 = scmp.eq.s32.totalorder %s26, 0
      %p68 = por %p66, %p67
      %p69 = scmp.ne.s32.totalorder %s57, %s58
      %p70 = scmp.eq.s32.totalorder %s27, 1
      %p71 = por %p69, %p70
      %p73 = scmp.ne.s32.totalorder %s58, %s72
      %p74 = scmp.eq.s32.totalorder %s27, 0
      %p75 = por %p73, %p74
      %s77 = sadd.s32 %s76, 1
      %p80 = scmp.eq.s32.totalorder %s21, 1
      %p81 = scmp.ne.s32.totalorder %s76, %s78
      %p82 = scmp.eq.s32.totalorder %s21, 0
      %p83 = por %p81, %p82
      %p84 = scmp.ne.s32.totalorder %s76, %s78
      %p85 = scmp.eq.s32.totalorder %s26, 1
      %p86 = por %p84, %p85
      %p87 = scmp.ne.s32.totalorder %s78, %s79
      %p88 = scmp.eq.s32.totalorder %s26, 0
      %p89 = por %p87, %p88
      %p90 = scmp.ne.s32.totalorder %s78, %s79
      %p91 = scmp.eq.s32.totalorder %s27, 1
      %p92 = por %p90, %p91
      %p94 = scmp.ne.s32.totalorder %s79, %s93
      %p95 = scmp.eq.s32.totalorder %s27, 0
      %p96 = por %p94, %p95
      %s98 = sadd.s32 %s97, 1
      %p101 = scmp.eq.s32.totalorder %s21, 1
      %p102 = scmp.ne.s32.totalorder %s97, %s99
      %p103 = scmp.eq.s32.totalorder %s21, 0
      %p104 = por %p102, %p103
      %p105 = scmp.ne.s32.totalorder %s97, %s99
      %p106 = scmp.eq.s32.totalorder %s26, 1
      %p107 = por %p105, %p106
      %p108 = scmp.ne.s32.totalorder %s99, %s100
      %p109 = scmp.eq.s32.totalorder %s26, 0
      %p110 = por %p108, %p109
      %p111 = scmp.ne.s32.totalorder %s99, %s100
      %p112 = scmp.eq.s32.totalorder %s27, 1
      %p113 = por %p111, %p112
      %p115 = scmp.ne.s32.totalorder %s100, %s114
      %p116 = scmp.eq.s32.totalorder %s27, 0
      %p117 = por %p115, %p116
      %s119 = sadd.s32 %s118, 1
      %p122 = scmp.eq.s32.totalorder %s21, 1
      %p123 = scmp.ne.s32.totalorder %s118, %s120
      %p124 = scmp.eq.s32.totalorder %s21, 0
      %p125 = por %p123, %p124
      %p126 = scmp.ne.s32.totalorder %s118, %s120
      %p127 = scmp.eq.s32.totalorder %s26, 1
      %p128 = por %p126, %p127
      %p129 = scmp.ne.s32.totalorder %s120, %s121
      %p130 = scmp.eq.s32.totalorder %s26, 0
      %p131 = por %p129, %p130
      %p132 = scmp.ne.s32.totalorder %s120, %s121
      %p133 = scmp.eq.s32.totalorder %s27, 1
      %p134 = por %p132, %p133
      %p136 = scmp.ne.s32.totalorder %s121, %s135
      %p137 = scmp.eq.s32.totalorder %s27, 0
      %p138 = por %p136, %p137
      %s140 = sadd.s32 %s139, 1
      %p143 = scmp.eq.s32.totalorder %s21, 1
      %p144 = scmp.ne.s32.totalorder %s139, %s141
      %p145 = scmp.eq.s32.totalorder %s21, 0
      %p146 = por %p144, %p145
      %p147 = scmp.ne.s32.totalorder %s139, %s141
      %p148 = scmp.eq.s32.totalorder %s26, 1
      %p149 = por %p147, %p148
      %p150 = scmp.ne.s32.totalorder %s141, %s142
      %p151 = scmp.eq.s32.totalorder %s26, 0
      %p152 = por %p150, %p151
      %p153 = scmp.ne.s32.totalorder %s141, %s142
      %p154 = scmp.eq.s32.totalorder %s27, 1
      %p155 = por %p153, %p154
      %p157 = scmp.ne.s32.totalorder %s142, %s156
      %p158 = scmp.eq.s32.totalorder %s27, 0
      %p159 = por %p157, %p158
      %s161 = sadd.s32 %s160, 1
      %p164 = scmp.eq.s32.totalorder %s21, 1
      %p165 = scmp.ne.s32.totalorder %s160, %s162
      %p166 = scmp.eq.s32.totalorder %s21, 0
      %p167 = por %p165, %p166
      %p168 = scmp.ne.s32.totalorder %s160, %s162
      %p169 = scmp.eq.s32.totalorder %s26, 1
      %p170 = por %p168, %p169
      %p171 = scmp.ne.s32.totalorder %s162, %s163
      %p172 = scmp.eq.s32.totalorder %s26, 0
      %p173 = por %p171, %p172
      %p174 = scmp.ne.s32.totalorder %s162, %s163
      %p175 = scmp.eq.s32.totalorder %s27, 1
      %p176 = por %p174, %p175
      %p178 = scmp.ne.s32.totalorder %s163, %s177
      %p179 = scmp.eq.s32.totalorder %s27, 0
      %p180 = por %p178, %p179
      %s181 = ssub.s32 %s21, %s28
      %p182 = scmp.eq.s32.totalorder %s181, 0
      %s184 = sadd.s32 %s183, 1
      %s185 = scalar_select %p182, %s183, %s184
      %p188 = pneg %p182
      %p189 = scmp.eq.s32.totalorder %s21, 1
      %p190 = por %p188, %p189
      %p191 = scmp.ne.s32.totalorder %s183, %s186
      %p192 = scmp.eq.s32.totalorder %s21, 0
      %p193 = por %p191, %p192
      %p194 = scmp.ne.s32.totalorder %s183, %s186
      %p195 = scmp.eq.s32.totalorder %s26, 1
      %p196 = por %p194, %p195
      %p197 = scmp.ne.s32.totalorder %s186, %s187
      %p198 = scmp.eq.s32.totalorder %s26, 0
      %p199 = por %p197, %p198
      %p200 = scmp.ne.s32.totalorder %s186, %s187
      %p201 = scmp.eq.s32.totalorder %s27, 1
      %p202 = por %p200, %p201
      %p204 = scmp.ne.s32.totalorder %s187, %s203
      %p205 = scmp.eq.s32.totalorder %s27, 0
      %p206 = por %p204, %p205
      %p207 = scmp.le.s32.totalorder 1, %s21
      %p208 = scmp.lt.s32.totalorder %s21, 3
      %p209 = pnand %p207, %p208
      %p210 = pneg %p209
      // Predicated region
      $region9: #{tpu_custom_call.1} parent=5 // pred_check
        _
      $region10: #{tpu_custom_call.1} parent=5 // pred_check_branch
        %212 = sbr.rel (%p209) target = $region12
      $region11: #{tpu_custom_call.1} parent=5 // pred_region
        %s213 = ssub.s32 %s21, 1
        // Predicated region
        $region13: #{tpu_custom_call.1} parent=11 // pred_check
          %p214 = pneg %p68
        $region14: #{tpu_custom_call.1} parent=11 // pred_check_branch
          %216 = sbr.rel (%p214) target = $region16
        $region15: #{tpu_custom_call.1} parent=11 // pred_region
          %s218 = ssub.s32 4096, 4096
          %219 = vsyncadd [#allocation6], %s218
          %s220 = sshll.u32 [#allocation5], 4
          %s221 = int_to_ptr.vmem [resolvable:$true] %s220
          %226 = dma.hbm_to_vmem [thread:$0]  %s1, 4096, %s221, [#allocation6], 256, 256, 16
        $region16: #{tpu_custom_call.1} parent=11 // pred_fallthru
          _
        // Predicated region
        $region17: #{tpu_custom_call.1} parent=11 // pred_check
          %p227 = pneg %p89
        $region18: #{tpu_custom_call.1} parent=11 // pred_check_branch
          %229 = sbr.rel (%p227) target = $region20
        $region19: #{tpu_custom_call.1} parent=11 // pred_region
          _
        $region20: #{tpu_custom_call.1} parent=11 // pred_fallthru
          _
        // Predicated region
        $region21: #{tpu_custom_call.1} parent=11 // pred_check
          %p230 = pneg %p110
        $region22: #{tpu_custom_call.1} parent=11 // pred_check_branch
          %232 = sbr.rel (%p230) target = $region24
        $region23: #{tpu_custom_call.1} parent=11 // pred_region
          %s234 = ssub.s32 8192, 8192
          %235 = vsyncadd [#allocation6], %s234
          %s236 = sshll.u32 [#allocation7], 4
          %s237 = int_to_ptr.vmem [resolvable:$true] %s236
          %242 = dma.hbm_to_vmem [thread:$0]  %s3, 8192, %s237, [#allocation6], 256, 256, 16
        $region24: #{tpu_custom_call.1} parent=11 // pred_fallthru
          _
        // Predicated region
        $region25: #{tpu_custom_call.1} parent=11 // pred_check
          %p243 = pneg %p131
        $region26: #{tpu_custom_call.1} parent=11 // pred_check_branch
          %245 = sbr.rel (%p243) target = $region28
        $region27: #{tpu_custom_call.1} parent=11 // pred_region
          _
        $region28: #{tpu_custom_call.1} parent=11 // pred_fallthru
          _
        // Predicated region
        $region29: #{tpu_custom_call.1} parent=11 // pred_check
          %p246 = pneg %p152
        $region30: #{tpu_custom_call.1} parent=11 // pred_check_branch
          %248 = sbr.rel (%p246) target = $region32
        $region31: #{tpu_custom_call.1} parent=11 // pred_region
          %s250 = ssub.s32 4096, 4096
          %251 = vsyncadd [#allocation9], %s250
          %s252 = sshll.u32 [#allocation8], 4
          %s253 = int_to_ptr.vmem [resolvable:$true] %s252
          %258 = dma.hbm_to_vmem [thread:$0]  %s5, 4096, %s253, [#allocation9], 128, 128, 8
        $region32: #{tpu_custom_call.1} parent=11 // pred_fallthru
          _
        // Predicated region
        $region33: #{tpu_custom_call.1} parent=11 // pred_check
          %p259 = pneg %p173
        $region34: #{tpu_custom_call.1} parent=11 // pred_check_branch
          %261 = sbr.rel (%p259) target = $region36
        $region35: #{tpu_custom_call.1} parent=11 // pred_region
          _
        $region36: #{tpu_custom_call.1} parent=11 // pred_fallthru
          _
      $region12: #{tpu_custom_call.1} parent=5 // pred_fallthru
        _
      %p262 = scmp.lt.s32.totalorder %s21, 2
      // Predicated region
      $region37: #{tpu_custom_call.1} parent=5 // pred_check
        %p263 = pneg %p262
      $region38: #{tpu_custom_call.1} parent=5 // pred_check_branch
        %265 = sbr.rel (%p263) target = $region40
      $region39: #{tpu_custom_call.1} parent=5 // pred_region
        // Predicated region
        $region41: #{tpu_custom_call.1} parent=39 // pred_check
          %p266 = pneg %p41
        $region42: #{tpu_custom_call.1} parent=39 // pred_check_branch
          %268 = sbr.rel (%p266) target = $region44
        $region43: #{tpu_custom_call.1} parent=39 // pred_region
          %s269 = sand.u32 %s31, 1
          %s270 = scalar_lea.sflag [#allocation3], %s269
          %s271 = sand.u32 %s31, 1
          %s272 = smul.addr %s271, 128
          %s273 = scalar_lea.vmem [#allocation2], %s272
          %s274 = smul.u32 16, %s21
          %s276 = ssub.s32 2048, 2048
          %277 = vsyncadd %s270, %s276
          %s278 = smul.addr %s274, 128
          %s279 = scalar_lea.hbm %s0, %s278
          %s280 = sshll.u32 %s273, 4
          %s281 = int_to_ptr.vmem [resolvable:$true] %s280
          %286 = dma.hbm_to_vmem [thread:$0]  %s279, 2048, %s281, %s270, 128, 128, 8
        $region44: #{tpu_custom_call.1} parent=39 // pred_fallthru
          _
      $region40: #{tpu_custom_call.1} parent=5 // pred_fallthru
        _
      %p287 = scmp.le.s32.totalorder 1, %s21
      %p288 = scmp.lt.s32.totalorder %s21, 3
      %p289 = pnand %p287, %p288
      %p290 = pneg %p289
      // Predicated region
      $region45: #{tpu_custom_call.1} parent=5 // pred_check
        _
      $region46: #{tpu_custom_call.1} parent=5 // pred_check_branch
        %292 = sbr.rel (%p289) target = $region48
      $region47: #{tpu_custom_call.1} parent=5 // pred_region
        %s293 = ssub.s32 %s21, 1
        %s294 = sand.u32 %s34, 1
        %s295 = scalar_lea.sflag [#allocation3], %s294
        %s296 = sand.u32 %s34, 1
        %s297 = smul.addr %s296, 128
        %s298 = scalar_lea.vmem [#allocation2], %s297
        // Predicated region
        $region49: #{tpu_custom_call.1} parent=47 // pred_check
          %p299 = pneg %p47
        $region50: #{tpu_custom_call.1} parent=47 // pred_check_branch
          %301 = sbr.rel (%p299) target = $region52
        $region51: #{tpu_custom_call.1} parent=47 // pred_region
          %302 = dma.done %s295, 2048
        $region52: #{tpu_custom_call.1} parent=47 // pred_fallthru
          _
        // Predicated region
        $region53: #{tpu_custom_call.1} parent=47 // pred_check
          %p303 = pneg %p68
        $region54: #{tpu_custom_call.1} parent=47 // pred_check_branch
          %305 = sbr.rel (%p303) target = $region56
        $region55: #{tpu_custom_call.1} parent=47 // pred_region
          %306 = dma.done [#allocation6], 4096
        $region56: #{tpu_custom_call.1} parent=47 // pred_fallthru
          _
        // Predicated region
        $region57: #{tpu_custom_call.1} parent=47 // pred_check
          %p307 = pneg %p110
        $region58: #{tpu_custom_call.1} parent=47 // pred_check_branch
          %309 = sbr.rel (%p307) target = $region60
        $region59: #{tpu_custom_call.1} parent=47 // pred_region
          %310 = dma.done [#allocation6], 8192
        $region60: #{tpu_custom_call.1} parent=47 // pred_fallthru
          _
        // Predicated region
        $region61: #{tpu_custom_call.1} parent=47 // pred_check
          %p311 = pneg %p152
        $region62: #{tpu_custom_call.1} parent=47 // pred_check_branch
          %313 = sbr.rel (%p311) target = $region64
        $region63: #{tpu_custom_call.1} parent=47 // pred_region
          %314 = dma.done [#allocation9], 4096
        $region64: #{tpu_custom_call.1} parent=47 // pred_fallthru
          _
        %s315 = sand.u32 %s34, 1
        %s316 = scalar_lea.sflag [#allocation3], %s315
        %s317 = sand.u32 %s34, 1
        %s318 = smul.addr %s317, 128
        %s319 = scalar_lea.vmem [#allocation2], %s318
        %p320 = pneg %p47
        %p321 = pneg %p44
        %p322 = pneg %p68
        %p323 = pneg %p65
        %p324 = pneg %p89
        %p325 = pneg %p86
        %p326 = pneg %p110
        %p327 = pneg %p107
        %p328 = pneg %p131
        %p329 = pneg %p128
        %p330 = pneg %p152
        %p331 = pneg %p149
        %p332 = pneg %p173
        %p333 = pneg %p170
        %p334 = pneg %p199
        %p335 = pneg %p196
        %s336 = sand.u32 %s186, 1
        %s337 = scalar_lea.sflag [#allocation4], %s336
        %s338 = sand.u32 %s186, 1
        %s339 = smul.addr %s338, 128
        %s340 = scalar_lea.vmem [#allocation10], %s339
        %s341 = smul.u32 16, %s26
        %s342 = smul.u32 16, %s26
        %v343 = vld [vmem:[%s298] sm:$0xff]
        %v344 = vld [vmem:[%s298 + $0x8] sm:$0xff]
        %v345 = vld [vmem:[%s298 + $0x10] sm:$0xff]
        %v346 = vld [vmem:[%s298 + $0x18] sm:$0xff]
        %v347 = vld [vmem:[%s298 + $0x20] sm:$0xff]
        %v348 = vld [vmem:[%s298 + $0x28] sm:$0xff]
        %v349 = vld [vmem:[%s298 + $0x30] sm:$0xff]
        %v350 = vld [vmem:[%s298 + $0x38] sm:$0xff]
        %v351 = vld [vmem:[%s298 + $0x40] sm:$0xff]
        %v352 = vld [vmem:[%s298 + $0x48] sm:$0xff]
        %v353 = vld [vmem:[%s298 + $0x50] sm:$0xff]
        %v354 = vld [vmem:[%s298 + $0x58] sm:$0xff]
        %v355 = vld [vmem:[%s298 + $0x60] sm:$0xff]
        %v356 = vld [vmem:[%s298 + $0x68] sm:$0xff]
        %v357 = vld [vmem:[%s298 + $0x70] sm:$0xff]
        %v358 = vld [vmem:[%s298 + $0x78] sm:$0xff]
        %v359 = vld [vmem:[#allocation5] sm:$0xff]
        %v360 = vld [vmem:[#allocation5 + $0x8] sm:$0xff]
        %v361 = vld [vmem:[#allocation5 + $0x10] sm:$0xff]
        %v362 = vld [vmem:[#allocation5 + $0x18] sm:$0xff]
        %v363 = vld [vmem:[#allocation5 + $0x20] sm:$0xff]
        %v364 = vld [vmem:[#allocation5 + $0x28] sm:$0xff]
        %v365 = vld [vmem:[#allocation5 + $0x30] sm:$0xff]
        %v366 = vld [vmem:[#allocation5 + $0x38] sm:$0xff]
        %v367 = vld [vmem:[#allocation5 + $0x40] sm:$0xff]
        %v368 = vld [vmem:[#allocation5 + $0x48] sm:$0xff]
        %v369 = vld [vmem:[#allocation5 + $0x50] sm:$0xff]
        %v370 = vld [vmem:[#allocation5 + $0x58] sm:$0xff]
        %v371 = vld [vmem:[#allocation5 + $0x60] sm:$0xff]
        %v372 = vld [vmem:[#allocation5 + $0x68] sm:$0xff]
        %v373 = vld [vmem:[#allocation5 + $0x70] sm:$0xff]
        %v374 = vld [vmem:[#allocation5 + $0x78] sm:$0xff]
        %v375 = vld [vmem:[#allocation5 + $0x80] sm:$0xff]
        %v376 = vld [vmem:[#allocation5 + $0x88] sm:$0xff]
        %v377 = vld [vmem:[#allocation5 + $0x90] sm:$0xff]
        %v378 = vld [vmem:[#allocation5 + $0x98] sm:$0xff]
        %v379 = vld [vmem:[#allocation5 + $0xa0] sm:$0xff]
        %v380 = vld [vmem:[#allocation5 + $0xa8] sm:$0xff]
        %v381 = vld [vmem:[#allocation5 + $0xb0] sm:$0xff]
        %v382 = vld [vmem:[#allocation5 + $0xb8] sm:$0xff]
        %v383 = vld [vmem:[#allocation5 + $0xc0] sm:$0xff]
        %v384 = vld [vmem:[#allocation5 + $0xc8] sm:$0xff]
        %v385 = vld [vmem:[#allocation5 + $0xd0] sm:$0xff]
        %v386 = vld [vmem:[#allocation5 + $0xd8] sm:$0xff]
        %v387 = vld [vmem:[#allocation5 + $0xe0] sm:$0xff]
        %v388 = vld [vmem:[#allocation5 + $0xe8] sm:$0xff]
        %v389 = vld [vmem:[#allocation5 + $0xf0] sm:$0xff]
        %v390 = vld [vmem:[#allocation5 + $0xf8] sm:$0xff]
        %v391 = vld [vmem:[%s2] sm:$0x3]
        %v393 = vlaneseq
        %v394 = vshrl.u32 %v393, 7
        %v395 = vsub.s32 0, %v394
        %v396 = vrot.slane %v391, %v395
        %v397 = vlaneseq
        %v398 = vshrl.u32 %v397, 7
        %v399 = vsub.s32 1, %v398
        %v400 = vrot.slane %v391, %v399
        %403 = vmatprep.subr.mxu0 %v390
        %404 = vmatpush1.msra.mxu0 %v389
        %405 = vmatprep.subr.mxu0 %v388
        %406 = vmatpush1.msra.mxu0 %v387
        %407 = vmatprep.subr.mxu0 %v386
        %408 = vmatpush1.msra.mxu0 %v385
        %409 = vmatprep.subr.mxu0 %v384
        %410 = vmatpush1.msra.mxu0 %v383
        %411 = vmatprep.subr.mxu0 %v382
        %412 = vmatpush1.msra.mxu0 %v381
        %413 = vmatprep.subr.mxu0 %v380
        %414 = vmatpush1.msra.mxu0 %v379
        %415 = vmatprep.subr.mxu0 %v378
        %416 = vmatpush1.msra.mxu0 %v377
        %417 = vmatprep.subr.mxu0 %v376
        %418 = vmatpush1.msra.mxu0 %v375
        %419 = vmatprep.subr.mxu0 %v374
        %420 = vmatpush1.msra.mxu0 %v373
        %421 = vmatprep.subr.mxu0 %v372
        %422 = vmatpush1.msra.mxu0 %v371
        %423 = vmatprep.subr.mxu0 %v370
        %424 = vmatpush1.msra.mxu0 %v369
        %425 = vmatprep.subr.mxu0 %v368
        %426 = vmatpush1.msra.mxu0 %v367
        %427 = vmatprep.subr.mxu0 %v366
        %428 = vmatpush1.msra.mxu0 %v365
        %429 = vmatprep.subr.mxu0 %v364
        %430 = vmatpush1.msra.mxu0 %v363
        %431 = vmatprep.subr.mxu0 %v362
        %432 = vmatpush1.msra.mxu0 %v361
        %433 = vmatprep.subr.mxu0 %v360
        %434 = vmatpush1.msra.mxu0 %v359
        %435 = vmatprep.subr.mxu0 0.0
        %436 = vmatpush2.msra.mxu0 0.0
        %437 = vmatprep.subr.mxu0 0.0
        %438 = vmatpush2.msra.mxu0 0.0
        %439 = vmatprep.subr.mxu0 0.0
        %440 = vmatpush2.msra.mxu0 0.0
        %441 = vmatprep.subr.mxu0 0.0
        %442 = vmatpush2.msra.mxu0 0.0
        %443 = vmatprep.subr.mxu0 0.0
        %444 = vmatpush2.msra.mxu0 0.0
        %445 = vmatprep.subr.mxu0 0.0
        %446 = vmatpush2.msra.mxu0 0.0
        %447 = vmatprep.subr.mxu0 0.0
        %448 = vmatpush2.msra.mxu0 0.0
        %449 = vmatprep.subr.mxu0 0.0
        %450 = vmatpush2.msra.mxu0 0.0
        %451 = vmatprep.subr.mxu0 0.0
        %452 = vmatpush2.msra.mxu0 0.0
        %453 = vmatprep.subr.mxu0 0.0
        %454 = vmatpush2.msra.mxu0 0.0
        %455 = vmatprep.subr.mxu0 0.0
        %456 = vmatpush2.msra.mxu0 0.0
        %457 = vmatprep.subr.mxu0 0.0
        %458 = vmatpush2.msra.mxu0 0.0
        %459 = vmatprep.subr.mxu0 0.0
        %460 = vmatpush2.msra.mxu0 0.0
        %461 = vmatprep.subr.mxu0 0.0
        %462 = vmatpush2.msra.mxu0 0.0
        %463 = vmatprep.subr.mxu0 0.0
        %464 = vmatpush2.msra.mxu0 0.0
        %465 = vmatprep.subr.mxu0 0.0
        %466 = vmatpush2.msra.mxu0 0.0
        %467 = vmatprep.mubr.f32.mxu0 0.0
        %468 = vmatmul.mubr.f32.gmra.mxu0 %v343
        %v469 = vpop.f32.mrf.mxu0
        %v470 = vadd.f32 %v396, %v469
        %v471 = vpop.f32.mrf.mxu0
        %v472 = vadd.f32 %v400, %v471
        %473 = vmatprep.mubr.f32.mxu0 0.0
        %474 = vmatmul.mubr.f32.gmra.mxu0 %v344
        %v475 = vpop.f32.mrf.mxu0
        %v476 = vadd.f32 %v396, %v475
        %v477 = vpop.f32.mrf.mxu0
        %v478 = vadd.f32 %v400, %v477
        %479 = vmatprep.mubr.f32.mxu0 0.0
        %480 = vmatmul.mubr.f32.gmra.mxu0 %v345
        %v481 = vpop.f32.mrf.mxu0
        %v482 = vadd.f32 %v396, %v481
        %v483 = vpop.f32.mrf.mxu0
        %v484 = vadd.f32 %v400, %v483
        %485 = vmatprep.mubr.f32.mxu0 0.0
        %486 = vmatmul.mubr.f32.gmra.mxu0 %v346
        %v487 = vpop.f32.mrf.mxu0
        %v488 = vadd.f32 %v396, %v487
        %v489 = vpop.f32.mrf.mxu0
        %v490 = vadd.f32 %v400, %v489
        %491 = vmatprep.mubr.f32.mxu0 0.0
        %492 = vmatmul.mubr.f32.gmra.mxu0 %v347
        %v493 = vpop.f32.mrf.mxu0
        %v494 = vadd.f32 %v396, %v493
        %v495 = vpop.f32.mrf.mxu0
        %v496 = vadd.f32 %v400, %v495
        %497 = vmatprep.mubr.f32.mxu0 0.0
        %498 = vmatmul.mubr.f32.gmra.mxu0 %v348
        %v499 = vpop.f32.mrf.mxu0
        %v500 = vadd.f32 %v396, %v499
        %v501 = vpop.f32.mrf.mxu0
        %v502 = vadd.f32 %v400, %v501
        %503 = vmatprep.mubr.f32.mxu0 0.0
        %504 = vmatmul.mubr.f32.gmra.mxu0 %v349
        %v505 = vpop.f32.mrf.mxu0
        %v506 = vadd.f32 %v396, %v505
        %v507 = vpop.f32.mrf.mxu0
        %v508 = vadd.f32 %v400, %v507
        %509 = vmatprep.mubr.f32.mxu0 0.0
        %510 = vmatmul.mubr.f32.gmra.mxu0 %v350
        %v511 = vpop.f32.mrf.mxu0
        %v512 = vadd.f32 %v396, %v511
        %v513 = vpop.f32.mrf.mxu0
        %v514 = vadd.f32 %v400, %v513
        %515 = vmatprep.mubr.f32.mxu0 0.0
        %516 = vmatmul.mubr.f32.gmra.mxu0 %v351
        %v517 = vpop.f32.mrf.mxu0
        %v518 = vadd.f32 %v396, %v517
        %v519 = vpop.f32.mrf.mxu0
        %v520 = vadd.f32 %v400, %v519
        %521 = vmatprep.mubr.f32.mxu0 0.0
        %522 = vmatmul.mubr.f32.gmra.mxu0 %v352
        %v523 = vpop.f32.mrf.mxu0
        %v524 = vadd.f32 %v396, %v523
        %v525 = vpop.f32.mrf.mxu0
        %v526 = vadd.f32 %v400, %v525
        %527 = vmatprep.mubr.f32.mxu0 0.0
        %528 = vmatmul.mubr.f32.gmra.mxu0 %v353
        %v529 = vpop.f32.mrf.mxu0
        %v530 = vadd.f32 %v396, %v529
        %v531 = vpop.f32.mrf.mxu0
        %v532 = vadd.f32 %v400, %v531
        %533 = vmatprep.mubr.f32.mxu0 0.0
        %534 = vmatmul.mubr.f32.gmra.mxu0 %v354
        %v535 = vpop.f32.mrf.mxu0
        %v536 = vadd.f32 %v396, %v535
        %v537 = vpop.f32.mrf.mxu0
        %v538 = vadd.f32 %v400, %v537
        %539 = vmatprep.mubr.f32.mxu0 0.0
        %540 = vmatmul.mubr.f32.gmra.mxu0 %v355
        %v541 = vpop.f32.mrf.mxu0
        %v542 = vadd.f32 %v396, %v541
        %v543 = vpop.f32.mrf.mxu0
        %v544 = vadd.f32 %v400, %v543
        %545 = vmatprep.mubr.f32.mxu0 0.0
        %546 = vmatmul.mubr.f32.gmra.mxu0 %v356
        %v547 = vpop.f32.mrf.mxu0
        %v548 = vadd.f32 %v396, %v547
        %v549 = vpop.f32.mrf.mxu0
        %v550 = vadd.f32 %v400, %v549
        %551 = vmatprep.mubr.f32.mxu0 0.0
        %552 = vmatmul.mubr.f32.gmra.mxu0 %v357
        %v553 = vpop.f32.mrf.mxu0
        %v554 = vadd.f32 %v396, %v553
        %v555 = vpop.f32.mrf.mxu0
        %v556 = vadd.f32 %v400, %v555
        %557 = vmatprep.mubr.f32.mxu0 0.0
        %558 = vmatmul.mubr.f32.gmra.mxu0 %v358
        %v559 = vpop.f32.mrf.mxu0
        %v560 = vadd.f32 %v396, %v559
        %v561 = vpop.f32.mrf.mxu0
        %v562 = vadd.f32 %v400, %v561
        %563 = vdwg.mxu0
        %v564 = vmax.f32 %v470, 0.0
        %v565 = vmax.f32 %v472, 0.0
        %v566 = vmax.f32 %v476, 0.0
        %v567 = vmax.f32 %v478, 0.0
        %v568 = vmax.f32 %v482, 0.0
        %v569 = vmax.f32 %v484, 0.0
        %v570 = vmax.f32 %v488, 0.0
        %v571 = vmax.f32 %v490, 0.0
        %v572 = vmax.f32 %v494, 0.0
        %v573 = vmax.f32 %v496, 0.0
        %v574 = vmax.f32 %v500, 0.0
        %v575 = vmax.f32 %v502, 0.0
        %v576 = vmax.f32 %v506, 0.0
        %v577 = vmax.f32 %v508, 0.0
        %v578 = vmax.f32 %v512, 0.0
        %v579 = vmax.f32 %v514, 0.0
        %v580 = vmax.f32 %v518, 0.0
        %v581 = vmax.f32 %v520, 0.0
        %v582 = vmax.f32 %v524, 0.0
        %v583 = vmax.f32 %v526, 0.0
        %v584 = vmax.f32 %v530, 0.0
        %v585 = vmax.f32 %v532, 0.0
        %v586 = vmax.f32 %v536, 0.0
        %v587 = vmax.f32 %v538, 0.0
        %v588 = vmax.f32 %v542, 0.0
        %v589 = vmax.f32 %v544, 0.0
        %v590 = vmax.f32 %v548, 0.0
        %v591 = vmax.f32 %v550, 0.0
        %v592 = vmax.f32 %v554, 0.0
        %v593 = vmax.f32 %v556, 0.0
        %v594 = vmax.f32 %v560, 0.0
        %v595 = vmax.f32 %v562, 0.0
        %v596 = vld [vmem:[#allocation7] sm:$0xff]
        %v597 = vld [vmem:[#allocation7 + $0x8] sm:$0xff]
        %v598 = vld [vmem:[#allocation7 + $0x10] sm:$0xff]
        %v599 = vld [vmem:[#allocation7 + $0x18] sm:$0xff]
        %v600 = vld [vmem:[#allocation7 + $0x20] sm:$0xff]
        %v601 = vld [vmem:[#allocation7 + $0x28] sm:$0xff]
        %v602 = vld [vmem:[#allocation7 + $0x30] sm:$0xff]
        %v603 = vld [vmem:[#allocation7 + $0x38] sm:$0xff]
        %v604 = vld [vmem:[#allocation7 + $0x40] sm:$0xff]
        %v605 = vld [vmem:[#allocation7 + $0x48] sm:$0xff]
        %v606 = vld [vmem:[#allocation7 + $0x50] sm:$0xff]
        %v607 = vld [vmem:[#allocation7 + $0x58] sm:$0xff]
        %v608 = vld [vmem:[#allocation7 + $0x60] sm:$0xff]
        %v609 = vld [vmem:[#allocation7 + $0x68] sm:$0xff]
        %v610 = vld [vmem:[#allocation7 + $0x70] sm:$0xff]
        %v611 = vld [vmem:[#allocation7 + $0x78] sm:$0xff]
        %v612 = vld [vmem:[#allocation7 + $0x80] sm:$0xff]
        %v613 = vld [vmem:[#allocation7 + $0x88] sm:$0xff]
        %v614 = vld [vmem:[#allocation7 + $0x90] sm:$0xff]
        %v615 = vld [vmem:[#allocation7 + $0x98] sm:$0xff]
        %v616 = vld [vmem:[#allocation7 + $0xa0] sm:$0xff]
        %v617 = vld [vmem:[#allocation7 + $0xa8] sm:$0xff]
        %v618 = vld [vmem:[#allocation7 + $0xb0] sm:$0xff]
        %v619 = vld [vmem:[#allocation7 + $0xb8] sm:$0xff]
        %v620 = vld [vmem:[#allocation7 + $0xc0] sm:$0xff]
        %v621 = vld [vmem:[#allocation7 + $0xc8] sm:$0xff]
        %v622 = vld [vmem:[#allocation7 + $0xd0] sm:$0xff]
        %v623 = vld [vmem:[#allocation7 + $0xd8] sm:$0xff]
        %v624 = vld [vmem:[#allocation7 + $0xe0] sm:$0xff]
        %v625 = vld [vmem:[#allocation7 + $0xe8] sm:$0xff]
        %v626 = vld [vmem:[#allocation7 + $0xf0] sm:$0xff]
        %v627 = vld [vmem:[#allocation7 + $0xf8] sm:$0xff]
        %v628 = vld [vmem:[#allocation7 + $0x100] sm:$0xff]
        %v629 = vld [vmem:[#allocation7 + $0x108] sm:$0xff]
        %v630 = vld [vmem:[#allocation7 + $0x110] sm:$0xff]
        %v631 = vld [vmem:[#allocation7 + $0x118] sm:$0xff]
        %v632 = vld [vmem:[#allocation7 + $0x120] sm:$0xff]
        %v633 = vld [vmem:[#allocation7 + $0x128] sm:$0xff]
        %v634 = vld [vmem:[#allocation7 + $0x130] sm:$0xff]
        %v635 = vld [vmem:[#allocation7 + $0x138] sm:$0xff]
        %v636 = vld [vmem:[#allocation7 + $0x140] sm:$0xff]
        %v637 = vld [vmem:[#allocation7 + $0x148] sm:$0xff]
        %v638 = vld [vmem:[#allocation7 + $0x150] sm:$0xff]
        %v639 = vld [vmem:[#allocation7 + $0x158] sm:$0xff]
        %v640 = vld [vmem:[#allocation7 + $0x160] sm:$0xff]
        %v641 = vld [vmem:[#allocation7 + $0x168] sm:$0xff]
        %v642 = vld [vmem:[#allocation7 + $0x170] sm:$0xff]
        %v643 = vld [vmem:[#allocation7 + $0x178] sm:$0xff]
        %v644 = vld [vmem:[#allocation7 + $0x180] sm:$0xff]
        %v645 = vld [vmem:[#allocation7 + $0x188] sm:$0xff]
        %v646 = vld [vmem:[#allocation7 + $0x190] sm:$0xff]
        %v647 = vld [vmem:[#allocation7 + $0x198] sm:$0xff]
        %v648 = vld [vmem:[#allocation7 + $0x1a0] sm:$0xff]
        %v649 = vld [vmem:[#allocation7 + $0x1a8] sm:$0xff]
        %v650 = vld [vmem:[#allocation7 + $0x1b0] sm:$0xff]
        %v651 = vld [vmem:[#allocation7 + $0x1b8] sm:$0xff]
        %v652 = vld [vmem:[#allocation7 + $0x1c0] sm:$0xff]
        %v653 = vld [vmem:[#allocation7 + $0x1c8] sm:$0xff]
        %v654 = vld [vmem:[#allocation7 + $0x1d0] sm:$0xff]
        %v655 = vld [vmem:[#allocation7 + $0x1d8] sm:$0xff]
        %v656 = vld [vmem:[#allocation7 + $0x1e0] sm:$0xff]
        %v657 = vld [vmem:[#allocation7 + $0x1e8] sm:$0xff]
        %v658 = vld [vmem:[#allocation7 + $0x1f0] sm:$0xff]
        %v659 = vld [vmem:[#allocation7 + $0x1f8] sm:$0xff]
        %v660 = vld [vmem:[%s4] sm:$0x3]
        %v662 = vlaneseq
        %v663 = vshrl.u32 %v662, 7
        %v664 = vsub.s32 0, %v663
        %v665 = vrot.slane %v660, %v664
        %v666 = vlaneseq
        %v667 = vshrl.u32 %v666, 7
        %v668 = vsub.s32 1, %v667
        %v669 = vrot.slane %v660, %v668
        %672 = vmatprep.subr.mxu0 %v627
        %673 = vmatpush1.msra.mxu0 %v626
        %674 = vmatprep.subr.mxu0 %v625
        %675 = vmatpush1.msra.mxu0 %v624
        %676 = vmatprep.subr.mxu0 %v623
        %677 = vmatpush1.msra.mxu0 %v622
        %678 = vmatprep.subr.mxu0 %v621
        %679 = vmatpush1.msra.mxu0 %v620
        %680 = vmatprep.subr.mxu0 %v619
        %681 = vmatpush1.msra.mxu0 %v618
        %682 = vmatprep.subr.mxu0 %v617
        %683 = vmatpush1.msra.mxu0 %v616
        %684 = vmatprep.subr.mxu0 %v615
        %685 = vmatpush1.msra.mxu0 %v614
        %686 = vmatprep.subr.mxu0 %v613
        %687 = vmatpush1.msra.mxu0 %v612
        %688 = vmatprep.subr.mxu0 %v611
        %689 = vmatpush1.msra.mxu0 %v610
        %690 = vmatprep.subr.mxu0 %v609
        %691 = vmatpush1.msra.mxu0 %v608
        %692 = vmatprep.subr.mxu0 %v607
        %693 = vmatpush1.msra.mxu0 %v606
        %694 = vmatprep.subr.mxu0 %v605
        %695 = vmatpush1.msra.mxu0 %v604
        %696 = vmatprep.subr.mxu0 %v603
        %697 = vmatpush1.msra.mxu0 %v602
        %698 = vmatprep.subr.mxu0 %v601
        %699 = vmatpush1.msra.mxu0 %v600
        %700 = vmatprep.subr.mxu0 %v599
        %701 = vmatpush1.msra.mxu0 %v598
        %702 = vmatprep.subr.mxu0 %v597
        %703 = vmatpush1.msra.mxu0 %v596
        %704 = vmatprep.subr.mxu0 %v659
        %705 = vmatpush2.msra.mxu0 %v658
        %706 = vmatprep.subr.mxu0 %v657
        %707 = vmatpush2.msra.mxu0 %v656
        %708 = vmatprep.subr.mxu0 %v655
        %709 = vmatpush2.msra.mxu0 %v654
        %710 = vmatprep.subr.mxu0 %v653
        %711 = vmatpush2.msra.mxu0 %v652
        %712 = vmatprep.subr.mxu0 %v651
        %713 = vmatpush2.msra.mxu0 %v650
        %714 = vmatprep.subr.mxu0 %v649
        %715 = vmatpush2.msra.mxu0 %v648
        %716 = vmatprep.subr.mxu0 %v647
        %717 = vmatpush2.msra.mxu0 %v646
        %718 = vmatprep.subr.mxu0 %v645
        %719 = vmatpush2.msra.mxu0 %v644
        %720 = vmatprep.subr.mxu0 %v643
        %721 = vmatpush2.msra.mxu0 %v642
        %722 = vmatprep.subr.mxu0 %v641
        %723 = vmatpush2.msra.mxu0 %v640
        %724 = vmatprep.subr.mxu0 %v639
        %725 = vmatpush2.msra.mxu0 %v638
        %726 = vmatprep.subr.mxu0 %v637
        %727 = vmatpush2.msra.mxu0 %v636
        %728 = vmatprep.subr.mxu0 %v635
        %729 = vmatpush2.msra.mxu0 %v634
        %730 = vmatprep.subr.mxu0 %v633
        %731 = vmatpush2.msra.mxu0 %v632
        %732 = vmatprep.subr.mxu0 %v631
        %733 = vmatpush2.msra.mxu0 %v630
        %734 = vmatprep.subr.mxu0 %v629
        %735 = vmatpush2.msra.mxu0 %v628
        %736 = vmatprep.mubr.f32.mxu0 %v565
        %737 = vmatmul.mubr.f32.gmra.mxu0 %v564
        %v738 = vpop.f32.mrf.mxu0
        %v739 = vadd.f32 %v665, %v738
        %v740 = vpop.f32.mrf.mxu0
        %v741 = vadd.f32 %v669, %v740
        %742 = vmatprep.mubr.f32.mxu0 %v567
        %743 = vmatmul.mubr.f32.gmra.mxu0 %v566
        %v744 = vpop.f32.mrf.mxu0
        %v745 = vadd.f32 %v665, %v744
        %v746 = vpop.f32.mrf.mxu0
        %v747 = vadd.f32 %v669, %v746
        %748 = vmatprep.mubr.f32.mxu0 %v569
        %749 = vmatmul.mubr.f32.gmra.mxu0 %v568
        %v750 = vpop.f32.mrf.mxu0
        %v751 = vadd.f32 %v665, %v750
        %v752 = vpop.f32.mrf.mxu0
        %v753 = vadd.f32 %v669, %v752
        %754 = vmatprep.mubr.f32.mxu0 %v571
        %755 = vmatmul.mubr.f32.gmra.mxu0 %v570
        %v756 = vpop.f32.mrf.mxu0
        %v757 = vadd.f32 %v665, %v756
        %v758 = vpop.f32.mrf.mxu0
        %v759 = vadd.f32 %v669, %v758
        %760 = vmatprep.mubr.f32.mxu0 %v573
        %761 = vmatmul.mubr.f32.gmra.mxu0 %v572
        %v762 = vpop.f32.mrf.mxu0
        %v763 = vadd.f32 %v665, %v762
        %v764 = vpop.f32.mrf.mxu0
        %v765 = vadd.f32 %v669, %v764
        %766 = vmatprep.mubr.f32.mxu0 %v575
        %767 = vmatmul.mubr.f32.gmra.mxu0 %v574
        %v768 = vpop.f32.mrf.mxu0
        %v769 = vadd.f32 %v665, %v768
        %v770 = vpop.f32.mrf.mxu0
        %v771 = vadd.f32 %v669, %v770
        %772 = vmatprep.mubr.f32.mxu0 %v577
        %773 = vmatmul.mubr.f32.gmra.mxu0 %v576
        %v774 = vpop.f32.mrf.mxu0
        %v775 = vadd.f32 %v665, %v774
        %v776 = vpop.f32.mrf.mxu0
        %v777 = vadd.f32 %v669, %v776
        %778 = vmatprep.mubr.f32.mxu0 %v579
        %779 = vmatmul.mubr.f32.gmra.mxu0 %v578
        %v780 = vpop.f32.mrf.mxu0
        %v781 = vadd.f32 %v665, %v780
        %v782 = vpop.f32.mrf.mxu0
        %v783 = vadd.f32 %v669, %v782
        %784 = vmatprep.mubr.f32.mxu0 %v581
        %785 = vmatmul.mubr.f32.gmra.mxu0 %v580
        %v786 = vpop.f32.mrf.mxu0
        %v787 = vadd.f32 %v665, %v786
        %v788 = vpop.f32.mrf.mxu0
        %v789 = vadd.f32 %v669, %v788
        %790 = vmatprep.mubr.f32.mxu0 %v583
        %791 = vmatmul.mubr.f32.gmra.mxu0 %v582
        %v792 = vpop.f32.mrf.mxu0
        %v793 = vadd.f32 %v665, %v792
        %v794 = vpop.f32.mrf.mxu0
        %v795 = vadd.f32 %v669, %v794
        %796 = vmatprep.mubr.f32.mxu0 %v585
        %797 = vmatmul.mubr.f32.gmra.mxu0 %v584
        %v798 = vpop.f32.mrf.mxu0
        %v799 = vadd.f32 %v665, %v798
        %v800 = vpop.f32.mrf.mxu0
        %v801 = vadd.f32 %v669, %v800
        %802 = vmatprep.mubr.f32.mxu0 %v587
        %803 = vmatmul.mubr.f32.gmra.mxu0 %v586
        %v804 = vpop.f32.mrf.mxu0
        %v805 = vadd.f32 %v665, %v804
        %v806 = vpop.f32.mrf.mxu0
        %v807 = vadd.f32 %v669, %v806
        %808 = vmatprep.mubr.f32.mxu0 %v589
        %809 = vmatmul.mubr.f32.gmra.mxu0 %v588
        %v810 = vpop.f32.mrf.mxu0
        %v811 = vadd.f32 %v665, %v810
        %v812 = vpop.f32.mrf.mxu0
        %v813 = vadd.f32 %v669, %v812
        %814 = vmatprep.mubr.f32.mxu0 %v591
        %815 = vmatmul.mubr.f32.gmra.mxu0 %v590
        %v816 = vpop.f32.mrf.mxu0
        %v817 = vadd.f32 %v665, %v816
        %v818 = vpop.f32.mrf.mxu0
        %v819 = vadd.f32 %v669, %v818
        %820 = vmatprep.mubr.f32.mxu0 %v593
        %821 = vmatmul.mubr.f32.gmra.mxu0 %v592
        %v822 = vpop.f32.mrf.mxu0
        %v823 = vadd.f32 %v665, %v822
        %v824 = vpop.f32.mrf.mxu0
        %v825 = vadd.f32 %v669, %v824
        %826 = vmatprep.mubr.f32.mxu0 %v595
        %827 = vmatmul.mubr.f32.gmra.mxu0 %v594
        %v828 = vpop.f32.mrf.mxu0
        %v829 = vadd.f32 %v665, %v828
        %v830 = vpop.f32.mrf.mxu0
        %v831 = vadd.f32 %v669, %v830
        %832 = vdwg.mxu0
        %v833 = vmax.f32 %v739, 0.0
        %v834 = vmax.f32 %v741, 0.0
        %v835 = vmax.f32 %v745, 0.0
        %v836 = vmax.f32 %v747, 0.0
        %v837 = vmax.f32 %v751, 0.0
        %v838 = vmax.f32 %v753, 0.0
        %v839 = vmax.f32 %v757, 0.0
        %v840 = vmax.f32 %v759, 0.0
        %v841 = vmax.f32 %v763, 0.0
        %v842 = vmax.f32 %v765, 0.0
        %v843 = vmax.f32 %v769, 0.0
        %v844 = vmax.f32 %v771, 0.0
        %v845 = vmax.f32 %v775, 0.0
        %v846 = vmax.f32 %v777, 0.0
        %v847 = vmax.f32 %v781, 0.0
        %v848 = vmax.f32 %v783, 0.0
        %v849 = vmax.f32 %v787, 0.0
        %v850 = vmax.f32 %v789, 0.0
        %v851 = vmax.f32 %v793, 0.0
        %v852 = vmax.f32 %v795, 0.0
        %v853 = vmax.f32 %v799, 0.0
        %v854 = vmax.f32 %v801, 0.0
        %v855 = vmax.f32 %v805, 0.0
        %v856 = vmax.f32 %v807, 0.0
        %v857 = vmax.f32 %v811, 0.0
        %v858 = vmax.f32 %v813, 0.0
        %v859 = vmax.f32 %v817, 0.0
        %v860 = vmax.f32 %v819, 0.0
        %v861 = vmax.f32 %v823, 0.0
        %v862 = vmax.f32 %v825, 0.0
        %v863 = vmax.f32 %v829, 0.0
        %v864 = vmax.f32 %v831, 0.0
        %v865 = vld [vmem:[#allocation8] sm:$0xff]
        %v866 = vld [vmem:[#allocation8 + $0x8] sm:$0xff]
        %v867 = vld [vmem:[#allocation8 + $0x10] sm:$0xff]
        %v868 = vld [vmem:[#allocation8 + $0x18] sm:$0xff]
        %v869 = vld [vmem:[#allocation8 + $0x20] sm:$0xff]
        %v870 = vld [vmem:[#allocation8 + $0x28] sm:$0xff]
        %v871 = vld [vmem:[#allocation8 + $0x30] sm:$0xff]
        %v872 = vld [vmem:[#allocation8 + $0x38] sm:$0xff]
        %v873 = vld [vmem:[#allocation8 + $0x40] sm:$0xff]
        %v874 = vld [vmem:[#allocation8 + $0x48] sm:$0xff]
        %v875 = vld [vmem:[#allocation8 + $0x50] sm:$0xff]
        %v876 = vld [vmem:[#allocation8 + $0x58] sm:$0xff]
        %v877 = vld [vmem:[#allocation8 + $0x60] sm:$0xff]
        %v878 = vld [vmem:[#allocation8 + $0x68] sm:$0xff]
        %v879 = vld [vmem:[#allocation8 + $0x70] sm:$0xff]
        %v880 = vld [vmem:[#allocation8 + $0x78] sm:$0xff]
        %v881 = vld [vmem:[#allocation8 + $0x80] sm:$0xff]
        %v882 = vld [vmem:[#allocation8 + $0x88] sm:$0xff]
        %v883 = vld [vmem:[#allocation8 + $0x90] sm:$0xff]
        %v884 = vld [vmem:[#allocation8 + $0x98] sm:$0xff]
        %v885 = vld [vmem:[#allocation8 + $0xa0] sm:$0xff]
        %v886 = vld [vmem:[#allocation8 + $0xa8] sm:$0xff]
        %v887 = vld [vmem:[#allocation8 + $0xb0] sm:$0xff]
        %v888 = vld [vmem:[#allocation8 + $0xb8] sm:$0xff]
        %v889 = vld [vmem:[#allocation8 + $0xc0] sm:$0xff]
        %v890 = vld [vmem:[#allocation8 + $0xc8] sm:$0xff]
        %v891 = vld [vmem:[#allocation8 + $0xd0] sm:$0xff]
        %v892 = vld [vmem:[#allocation8 + $0xd8] sm:$0xff]
        %v893 = vld [vmem:[#allocation8 + $0xe0] sm:$0xff]
        %v894 = vld [vmem:[#allocation8 + $0xe8] sm:$0xff]
        %v895 = vld [vmem:[#allocation8 + $0xf0] sm:$0xff]
        %v896 = vld [vmem:[#allocation8 + $0xf8] sm:$0xff]
        %v897 = vld [vmem:[%s6] sm:$0x1]
        %v899 = vlaneseq
        %v900 = vshrl.u32 %v899, 7
        %v901 = vsub.s32 0, %v900
        %v902 = vrot.slane %v897, %v901
        %904 = vmatprep.subr.mxu0 0.0
        %905 = vmatpush1.msra.mxu0 %v880
        %906 = vmatprep.subr.mxu0 0.0
        %907 = vmatpush1.msra.mxu0 %v879
        %908 = vmatprep.subr.mxu0 0.0
        %909 = vmatpush1.msra.mxu0 %v878
        %910 = vmatprep.subr.mxu0 0.0
        %911 = vmatpush1.msra.mxu0 %v877
        %912 = vmatprep.subr.mxu0 0.0
        %913 = vmatpush1.msra.mxu0 %v876
        %914 = vmatprep.subr.mxu0 0.0
        %915 = vmatpush1.msra.mxu0 %v875
        %916 = vmatprep.subr.mxu0 0.0
        %917 = vmatpush1.msra.mxu0 %v874
        %918 = vmatprep.subr.mxu0 0.0
        %919 = vmatpush1.msra.mxu0 %v873
        %920 = vmatprep.subr.mxu0 0.0
        %921 = vmatpush1.msra.mxu0 %v872
        %922 = vmatprep.subr.mxu0 0.0
        %923 = vmatpush1.msra.mxu0 %v871
        %924 = vmatprep.subr.mxu0 0.0
        %925 = vmatpush1.msra.mxu0 %v870
        %926 = vmatprep.subr.mxu0 0.0
        %927 = vmatpush1.msra.mxu0 %v869
        %928 = vmatprep.subr.mxu0 0.0
        %929 = vmatpush1.msra.mxu0 %v868
        %930 = vmatprep.subr.mxu0 0.0
        %931 = vmatpush1.msra.mxu0 %v867
        %932 = vmatprep.subr.mxu0 0.0
        %933 = vmatpush1.msra.mxu0 %v866
        %934 = vmatprep.subr.mxu0 0.0
        %935 = vmatpush1.msra.mxu0 %v865
        %936 = vmatprep.subr.mxu0 0.0
        %937 = vmatpush2.msra.mxu0 %v896
        %938 = vmatprep.subr.mxu0 0.0
        %939 = vmatpush2.msra.mxu0 %v895
        %940 = vmatprep.subr.mxu0 0.0
        %941 = vmatpush2.msra.mxu0 %v894
        %942 = vmatprep.subr.mxu0 0.0
        %943 = vmatpush2.msra.mxu0 %v893
        %944 = vmatprep.subr.mxu0 0.0
        %945 = vmatpush2.msra.mxu0 %v892
        %946 = vmatprep.subr.mxu0 0.0
        %947 = vmatpush2.msra.mxu0 %v891
        %948 = vmatprep.subr.mxu0 0.0
        %949 = vmatpush2.msra.mxu0 %v890
        %950 = vmatprep.subr.mxu0 0.0
        %951 = vmatpush2.msra.mxu0 %v889
        %952 = vmatprep.subr.mxu0 0.0
        %953 = vmatpush2.msra.mxu0 %v888
        %954 = vmatprep.subr.mxu0 0.0
        %955 = vmatpush2.msra.mxu0 %v887
        %956 = vmatprep.subr.mxu0 0.0
        %957 = vmatpush2.msra.mxu0 %v886
        %958 = vmatprep.subr.mxu0 0.0
        %959 = vmatpush2.msra.mxu0 %v885
        %960 = vmatprep.subr.mxu0 0.0
        %961 = vmatpush2.msra.mxu0 %v884
        %962 = vmatprep.subr.mxu0 0.0
        %963 = vmatpush2.msra.mxu0 %v883
        %964 = vmatprep.subr.mxu0 0.0
        %965 = vmatpush2.msra.mxu0 %v882
        %966 = vmatprep.subr.mxu0 0.0
        %967 = vmatpush2.msra.mxu0 %v881
        %968 = vmatprep.mubr.f32.mxu0 %v834
        %969 = vmatmul.mubr.f32.gmra.mxu0 %v833
        %v970 = vpop.f32.mrf.mxu0
        %v971 = vadd.f32 %v902, %v970
        %v972 = vpop.f32.mrf.mxu0
        %973 = vmatprep.mubr.f32.mxu0 %v836
        %974 = vmatmul.mubr.f32.gmra.mxu0 %v835
        %v975 = vpop.f32.mrf.mxu0
        %v976 = vadd.f32 %v902, %v975
        %v977 = vpop.f32.mrf.mxu0
        %978 = vmatprep.mubr.f32.mxu0 %v838
        %979 = vmatmul.mubr.f32.gmra.mxu0 %v837
        %v980 = vpop.f32.mrf.mxu0
        %v981 = vadd.f32 %v902, %v980
        %v982 = vpop.f32.mrf.mxu0
        %983 = vmatprep.mubr.f32.mxu0 %v840
        %984 = vmatmul.mubr.f32.gmra.mxu0 %v839
        %v985 = vpop.f32.mrf.mxu0
        %v986 = vadd.f32 %v902, %v985
        %v987 = vpop.f32.mrf.mxu0
        %988 = vmatprep.mubr.f32.mxu0 %v842
        %989 = vmatmul.mubr.f32.gmra.mxu0 %v841
        %v990 = vpop.f32.mrf.mxu0
        %v991 = vadd.f32 %v902, %v990
        %v992 = vpop.f32.mrf.mxu0
        %993 = vmatprep.mubr.f32.mxu0 %v844
        %994 = vmatmul.mubr.f32.gmra.mxu0 %v843
        %v995 = vpop.f32.mrf.mxu0
        %v996 = vadd.f32 %v902, %v995
        %v997 = vpop.f32.mrf.mxu0
        %998 = vmatprep.mubr.f32.mxu0 %v846
        %999 = vmatmul.mubr.f32.gmra.mxu0 %v845
        %v1000 = vpop.f32.mrf.mxu0
        %v1001 = vadd.f32 %v902, %v1000
        %v1002 = vpop.f32.mrf.mxu0
        %1003 = vmatprep.mubr.f32.mxu0 %v848
        %1004 = vmatmul.mubr.f32.gmra.mxu0 %v847
        %v1005 = vpop.f32.mrf.mxu0
        %v1006 = vadd.f32 %v902, %v1005
        %v1007 = vpop.f32.mrf.mxu0
        %1008 = vmatprep.mubr.f32.mxu0 %v850
        %1009 = vmatmul.mubr.f32.gmra.mxu0 %v849
        %v1010 = vpop.f32.mrf.mxu0
        %v1011 = vadd.f32 %v902, %v1010
        %v1012 = vpop.f32.mrf.mxu0
        %1013 = vmatprep.mubr.f32.mxu0 %v852
        %1014 = vmatmul.mubr.f32.gmra.mxu0 %v851
        %v1015 = vpop.f32.mrf.mxu0
        %v1016 = vadd.f32 %v902, %v1015
        %v1017 = vpop.f32.mrf.mxu0
        %1018 = vmatprep.mubr.f32.mxu0 %v854
        %1019 = vmatmul.mubr.f32.gmra.mxu0 %v853
        %v1020 = vpop.f32.mrf.mxu0
        %v1021 = vadd.f32 %v902, %v1020
        %v1022 = vpop.f32.mrf.mxu0
        %1023 = vmatprep.mubr.f32.mxu0 %v856
        %1024 = vmatmul.mubr.f32.gmra.mxu0 %v855
        %v1025 = vpop.f32.mrf.mxu0
        %v1026 = vadd.f32 %v902, %v1025
        %v1027 = vpop.f32.mrf.mxu0
        %1028 = vmatprep.mubr.f32.mxu0 %v858
        %1029 = vmatmul.mubr.f32.gmra.mxu0 %v857
        %v1030 = vpop.f32.mrf.mxu0
        %v1031 = vadd.f32 %v902, %v1030
        %v1032 = vpop.f32.mrf.mxu0
        %1033 = vmatprep.mubr.f32.mxu0 %v860
        %1034 = vmatmul.mubr.f32.gmra.mxu0 %v859
        %v1035 = vpop.f32.mrf.mxu0
        %v1036 = vadd.f32 %v902, %v1035
        %v1037 = vpop.f32.mrf.mxu0
        %1038 = vmatprep.mubr.f32.mxu0 %v862
        %1039 = vmatmul.mubr.f32.gmra.mxu0 %v861
        %v1040 = vpop.f32.mrf.mxu0
        %v1041 = vadd.f32 %v902, %v1040
        %v1042 = vpop.f32.mrf.mxu0
        %1043 = vmatprep.mubr.f32.mxu0 %v864
        %1044 = vmatmul.mubr.f32.gmra.mxu0 %v863
        %v1045 = vpop.f32.mrf.mxu0
        %v1046 = vadd.f32 %v902, %v1045
        %v1047 = vpop.f32.mrf.mxu0
        %1048 = vdwg.mxu0
        %1049 = vmax.xlane.f32.xlu0 %v971
        %v1050 = vpop.xlane.xlu0 %1049
        %1051 = vmax.xlane.f32.xlu0 %v976
        %v1052 = vpop.xlane.xlu0 %1051
        %1053 = vmax.xlane.f32.xlu0 %v981
        %v1054 = vpop.xlane.xlu0 %1053
        %1055 = vmax.xlane.f32.xlu0 %v986
        %v1056 = vpop.xlane.xlu0 %1055
        %1057 = vmax.xlane.f32.xlu0 %v991
        %v1058 = vpop.xlane.xlu0 %1057
        %1059 = vmax.xlane.f32.xlu0 %v996
        %v1060 = vpop.xlane.xlu0 %1059
        %1061 = vmax.xlane.f32.xlu0 %v1001
        %v1062 = vpop.xlane.xlu0 %1061
        %1063 = vmax.xlane.f32.xlu0 %v1006
        %v1064 = vpop.xlane.xlu0 %1063
        %1065 = vmax.xlane.f32.xlu0 %v1011
        %v1066 = vpop.xlane.xlu0 %1065
        %1067 = vmax.xlane.f32.xlu0 %v1016
        %v1068 = vpop.xlane.xlu0 %1067
        %1069 = vmax.xlane.f32.xlu0 %v1021
        %v1070 = vpop.xlane.xlu0 %1069
        %1071 = vmax.xlane.f32.xlu0 %v1026
        %v1072 = vpop.xlane.xlu0 %1071
        %1073 = vmax.xlane.f32.xlu0 %v1031
        %v1074 = vpop.xlane.xlu0 %1073
        %1075 = vmax.xlane.f32.xlu0 %v1036
        %v1076 = vpop.xlane.xlu0 %1075
        %1077 = vmax.xlane.f32.xlu0 %v1041
        %v1078 = vpop.xlane.xlu0 %1077
        %1079 = vmax.xlane.f32.xlu0 %v1046
        %v1080 = vpop.xlane.xlu0 %1079
        %v1081 = vsub.f32 %v971, %v1050
        %v1082 = vsub.f32 %v976, %v1052
        %v1083 = vsub.f32 %v981, %v1054
        %v1084 = vsub.f32 %v986, %v1056
        %v1085 = vsub.f32 %v991, %v1058
        %v1086 = vsub.f32 %v996, %v1060
        %v1087 = vsub.f32 %v1001, %v1062
        %v1088 = vsub.f32 %v1006, %v1064
        %v1089 = vsub.f32 %v1011, %v1066
        %v1090 = vsub.f32 %v1016, %v1068
        %v1091 = vsub.f32 %v1021, %v1070
        %v1092 = vsub.f32 %v1026, %v1072
        %v1093 = vsub.f32 %v1031, %v1074
        %v1094 = vsub.f32 %v1036, %v1076
        %v1095 = vsub.f32 %v1041, %v1078
        %v1096 = vsub.f32 %v1046, %v1080
        %v1097 = vmul.f32 %v1081, 1.442695
        %v1098 = vpow.pop %v1097
        %v1099 = vmul.f32 %v1082, 1.442695
        %v1100 = vpow.pop %v1099
        %v1101 = vmul.f32 %v1083, 1.442695
        %v1102 = vpow.pop %v1101
        %v1103 = vmul.f32 %v1084, 1.442695
        %v1104 = vpow.pop %v1103
        %v1105 = vmul.f32 %v1085, 1.442695
        %v1106 = vpow.pop %v1105
        %v1107 = vmul.f32 %v1086, 1.442695
        %v1108 = vpow.pop %v1107
        %v1109 = vmul.f32 %v1087, 1.442695
        %v1110 = vpow.pop %v1109
        %v1111 = vmul.f32 %v1088, 1.442695
        %v1112 = vpow.pop %v1111
        %v1113 = vmul.f32 %v1089, 1.442695
        %v1114 = vpow.pop %v1113
        %v1115 = vmul.f32 %v1090, 1.442695
        %v1116 = vpow.pop %v1115
        %v1117 = vmul.f32 %v1091, 1.442695
        %v1118 = vpow.pop %v1117
        %v1119 = vmul.f32 %v1092, 1.442695
        %v1120 = vpow.pop %v1119
        %v1121 = vmul.f32 %v1093, 1.442695
        %v1122 = vpow.pop %v1121
        %v1123 = vmul.f32 %v1094, 1.442695
        %v1124 = vpow.pop %v1123
        %v1125 = vmul.f32 %v1095, 1.442695
        %v1126 = vpow.pop %v1125
        %v1127 = vmul.f32 %v1096, 1.442695
        %v1128 = vpow.pop %v1127
        %1129 = vadd.xlane.f32.xlu0 %v1098
        %v1130 = vpop.xlane.xlu0 %1129
        %1131 = vadd.xlane.f32.xlu0 %v1100
        %v1132 = vpop.xlane.xlu0 %1131
        %1133 = vadd.xlane.f32.xlu0 %v1102
        %v1134 = vpop.xlane.xlu0 %1133
        %1135 = vadd.xlane.f32.xlu0 %v1104
        %v1136 = vpop.xlane.xlu0 %1135
        %1137 = vadd.xlane.f32.xlu0 %v1106
        %v1138 = vpop.xlane.xlu0 %1137
        %1139 = vadd.xlane.f32.xlu0 %v1108
        %v1140 = vpop.xlane.xlu0 %1139
        %1141 = vadd.xlane.f32.xlu0 %v1110
        %v1142 = vpop.xlane.xlu0 %1141
        %1143 = vadd.xlane.f32.xlu0 %v1112
        %v1144 = vpop.xlane.xlu0 %1143
        %1145 = vadd.xlane.f32.xlu0 %v1114
        %v1146 = vpop.xlane.xlu0 %1145
        %1147 = vadd.xlane.f32.xlu0 %v1116
        %v1148 = vpop.xlane.xlu0 %1147
        %1149 = vadd.xlane.f32.xlu0 %v1118
        %v1150 = vpop.xlane.xlu0 %1149
        %1151 = vadd.xlane.f32.xlu0 %v1120
        %v1152 = vpop.xlane.xlu0 %1151
        %1153 = vadd.xlane.f32.xlu0 %v1122
        %v1154 = vpop.xlane.xlu0 %1153
        %1155 = vadd.xlane.f32.xlu0 %v1124
        %v1156 = vpop.xlane.xlu0 %1155
        %1157 = vadd.xlane.f32.xlu0 %v1126
        %v1158 = vpop.xlane.xlu0 %1157
        %1159 = vadd.xlane.f32.xlu0 %v1128
        %v1160 = vpop.xlane.xlu0 %1159
        %v1161 = vrcp.pop %v1130
        %v1162 = vrcp.pop %v1132
        %v1163 = vrcp.pop %v1134
        %v1164 = vrcp.pop %v1136
        %v1165 = vrcp.pop %v1138
        %v1166 = vrcp.pop %v1140
        %v1167 = vrcp.pop %v1142
        %v1168 = vrcp.pop %v1144
        %v1169 = vrcp.pop %v1146
        %v1170 = vrcp.pop %v1148
        %v1171 = vrcp.pop %v1150
        %v1172 = vrcp.pop %v1152
        %v1173 = vrcp.pop %v1154
        %v1174 = vrcp.pop %v1156
        %v1175 = vrcp.pop %v1158
        %v1176 = vrcp.pop %v1160
        %v1177 = vmul.f32 %v1098, %v1161
        %v1178 = vmul.f32 %v1100, %v1162
        %v1179 = vmul.f32 %v1102, %v1163
        %v1180 = vmul.f32 %v1104, %v1164
        %v1181 = vmul.f32 %v1106, %v1165
        %v1182 = vmul.f32 %v1108, %v1166
        %v1183 = vmul.f32 %v1110, %v1167
        %v1184 = vmul.f32 %v1112, %v1168
        %v1185 = vmul.f32 %v1114, %v1169
        %v1186 = vmul.f32 %v1116, %v1170
        %v1187 = vmul.f32 %v1118, %v1171
        %v1188 = vmul.f32 %v1120, %v1172
        %v1189 = vmul.f32 %v1122, %v1173
        %v1190 = vmul.f32 %v1124, %v1174
        %v1191 = vmul.f32 %v1126, %v1175
        %v1192 = vmul.f32 %v1128, %v1176
        %1193 = vst [vmem:[%s340] sm:$0xff] %v1177
        %1194 = vst [vmem:[%s340 + $0x8] sm:$0xff] %v1178
        %1195 = vst [vmem:[%s340 + $0x10] sm:$0xff] %v1179
        %1196 = vst [vmem:[%s340 + $0x18] sm:$0xff] %v1180
        %1197 = vst [vmem:[%s340 + $0x20] sm:$0xff] %v1181
        %1198 = vst [vmem:[%s340 + $0x28] sm:$0xff] %v1182
        %1199 = vst [vmem:[%s340 + $0x30] sm:$0xff] %v1183
        %1200 = vst [vmem:[%s340 + $0x38] sm:$0xff] %v1184
        %1201 = vst [vmem:[%s340 + $0x40] sm:$0xff] %v1185
        %1202 = vst [vmem:[%s340 + $0x48] sm:$0xff] %v1186
        %1203 = vst [vmem:[%s340 + $0x50] sm:$0xff] %v1187
        %1204 = vst [vmem:[%s340 + $0x58] sm:$0xff] %v1188
        %1205 = vst [vmem:[%s340 + $0x60] sm:$0xff] %v1189
        %1206 = vst [vmem:[%s340 + $0x68] sm:$0xff] %v1190
        %1207 = vst [vmem:[%s340 + $0x70] sm:$0xff] %v1191
        %1208 = vst [vmem:[%s340 + $0x78] sm:$0xff] %v1192
        %s1209 = sand.u32 %s186, 1
        %s1210 = scalar_lea.sflag [#allocation4], %s1209
        %s1211 = sand.u32 %s186, 1
        %s1212 = smul.addr %s1211, 128
        %s1213 = scalar_lea.vmem [#allocation10], %s1212
        // Predicated region
        $region65: #{tpu_custom_call.1} parent=47 // pred_check
          %p1214 = pneg %p196
        $region66: #{tpu_custom_call.1} parent=47 // pred_check_branch
          %1216 = sbr.rel (%p1214) target = $region68
        $region67: #{tpu_custom_call.1} parent=47 // pred_region
          %s1217 = smul.u32 16, %s26
          %s1219 = ssub.s32 2048, 2048
          %1220 = vsyncadd %s1210, %s1219
          %s1221 = smul.addr %s1217, 128
          %s1222 = scalar_lea.hbm %s7, %s1221
          %s1223 = sshll.u32 %s1213, 4
          %s1224 = int_to_ptr.vmem [resolvable:$true] %s1223
          %1229 = dma.vmem_to_hbm [thread:$0]  %s1224, 2048, %s1222, %s1210, 128, 128, 8
        $region68: #{tpu_custom_call.1} parent=47 // pred_fallthru
          _
      $region48: #{tpu_custom_call.1} parent=5 // pred_fallthru
        _
      %p1230 = scmp.le.s32.totalorder 2, %s21
      // Predicated region
      $region69: #{tpu_custom_call.1} parent=5 // pred_check
        %p1231 = pneg %p1230
      $region70: #{tpu_custom_call.1} parent=5 // pred_check_branch
        %1233 = sbr.rel (%p1231) target = $region72
      $region71: #{tpu_custom_call.1} parent=5 // pred_region
        %s1234 = ssub.s32 %s21, 2
        // Predicated region
        $region73: #{tpu_custom_call.1} parent=71 // pred_check
          %p1235 = pneg %p202
        $region74: #{tpu_custom_call.1} parent=71 // pred_check_branch
          %1237 = sbr.rel (%p1235) target = $region76
        $region75: #{tpu_custom_call.1} parent=71 // pred_region
          %s1238 = sand.u32 %s187, 1
          %s1239 = scalar_lea.sflag [#allocation4], %s1238
          %s1240 = sand.u32 %s187, 1
          %s1241 = smul.addr %s1240, 128
          %s1242 = scalar_lea.vmem [#allocation10], %s1241
          %1243 = dma.done %s1239, 2048
        $region76: #{tpu_custom_call.1} parent=71 // pred_fallthru
          _
      $region72: #{tpu_custom_call.1} parent=5 // pred_fallthru
        _
    $region6: #{tpu_custom_call.1} parent=1 // loop_footer
      %s25 = sadd.s32 1, %s21
    $region7: #{tpu_custom_call.1} parent=1 // loop_footer_branch
      %20 = sbr.rel target = $region3
    $region8: #{tpu_custom_call.1} parent=1 // loop_exit
      _
    %1244 = vsyncpa [#allocation3], 1
    %s1245 = scalar_lea.sflag [#allocation3], 1
    %1246 = vsyncpa %s1245, 1
    %1247 = vsyncpa [#allocation6], 1
    %1248 = vsyncpa [#allocation9], 1
    %1249 = vsyncpa [#allocation4], 1
    %s1250 = scalar_lea.sflag [#allocation4], 1
    %1251 = vsyncpa %s1250, 1

</llo_original>
